<compile_context>
chip_gen: v6e
topology: v6e:2x2x1
jax: 0.10.0
libtpu: 0.0.40
codegen_flags: <defaults>
</compile_context>

<pallas_src>
import jax
import jax.numpy as jnp
from jax import lax
from jax.experimental import pallas as pl
from jax.experimental.pallas import tpu as pltpu

BN_EPS = 1e-5


# --------------------------------------------------------------------------- #
# Kernel
# --------------------------------------------------------------------------- #
def autoint_kernel(x_ref, wcat_ref, bcat_ref, w1_ref, b1_ref,
                   w2r_ref, wfcr_ref, bias_ref, out_ref):
    H0 = w1_ref.shape[0]                        # static (from the ref shape)

    xc = x_ref[...]                             # [tb, D], bf16 preferred
    if xc.dtype != wcat_ref.dtype:              # no-op when fed bf16 upstream
        xc = xc.astype(wcat_ref.dtype)

    # ---- One MXU pass over x for BOTH branches (DNN layer 0 + attention V+res),
    #      shared ReLU (both branches are ReLU-activated in the module) ----
    z = jnp.dot(xc, wcat_ref[...], preferred_element_type=jnp.float32) + bcat_ref[...]
    z = jnp.maximum(z, 0.0)                     # [tb, H0 + A]

    h0 = z[:, :H0]                              # lane-tile aligned slice (H0 % 128 == 0)
    att = z[:, H0:]                             # == relu(x @ (Wv + Wres))

    # ---- second DNN linear; MXU, f32 accumulation ----
    h = jnp.dot(h0.astype(w1_ref.dtype), w1_ref[...],
                preferred_element_type=jnp.float32) + b1_ref[...]
    h = jnp.maximum(h, 0.0)                     # [tb, H1]

    # ---- N=1 output projections as VPU multiply + lane reduce (not MXU) ----
    dnn_out = jnp.sum(h * w2r_ref[...], axis=-1, keepdims=True)     # [tb, 1]
    att_fc = jnp.sum(att * wfcr_ref[...], axis=-1, keepdims=True)   # [tb, 1]

    out_ref[...] = jax.nn.sigmoid(dnn_out + att_fc + bias_ref[...])  # bias = b2 + bfc


# --------------------------------------------------------------------------- #
# Host-side parameter preparation (exact folds, then optional bf16 cast)
# --------------------------------------------------------------------------- #
def prepare_params(p, *, weights_dtype=jnp.bfloat16):
    """Folds are only valid for the 2-D [B, input_dim] feature-map path of this
    module (seq-len-1 attention => softmax == 1).  Guarded below."""
    assert p["w0"].ndim == 2 and p["wv"].ndim == 2 and p["w0"].shape[0] == p["wv"].shape[0], \
        "seq-len-1 attention fold requires the 2-D [B, input_dim] feature-map path"

    scale = p["bn_gamma"] * lax.rsqrt(p["bn_var"] + BN_EPS)        # [1, D]
    shift = p["bn_beta"] - p["bn_mean"] * scale                    # [1, D]
    w0_folded = scale.reshape(-1, 1) * p["w0"]                     # BN -> linear0
    b0_folded = p["b0"] + shift @ p["w0"]
    w_attn = p["wv"] + p["wres"]        # relu(xWv + xWres) == relu(x(Wv + Wres))

    A = p["wv"].shape[1]
    w_cat = jnp.concatenate([w0_folded, w_attn], axis=1)           # [D, H0+A]
    b_cat = jnp.concatenate([b0_folded, jnp.zeros((1, A), jnp.float32)], axis=1)

    return {
        "w_cat": w_cat.astype(weights_dtype),                      # [D, H0+A]
        "b_cat": b_cat.astype(jnp.float32),                        # [1, H0+A]
        "w1": p["w1"].astype(weights_dtype),                       # [H0, H1]
        "b1": p["b1"].astype(jnp.float32),                         # [1, H1]
        "w2_row": p["w2"].T.astype(jnp.float32),                   # [1, H1]
        "wfc_row": p["wfc"].T.astype(jnp.float32),                 # [1, A]
        "bias": (p["b2"] + p["bfc"]).astype(jnp.float32),          # [1, 1]
    }


# --------------------------------------------------------------------------- #
# Generation-aware tiling helpers
# --------------------------------------------------------------------------- #
def _vmem_capacity_bytes():
    try:
        return int(pltpu.get_tpu_info().vmem_capacity_bytes)
    except Exception:
        return 64 << 20            # conservative fallback: v7x has the smallest VMEM


def _resident_weight_bytes(prep):
    return sum(int(v.size) * jnp.dtype(v.dtype).itemsize for v in prep.values())


def _pick_batch_tile(B, D, prep, x_itemsize, x_buffers):
    """VMEM-budget-driven batch tile: ~48 MiB budget on v7x (64 MiB physical),
    ~100 MiB on v5e/v6e (128 MiB).  At least 2 grid steps when B allows, so
    v7x's two TensorCores both get work (harmless on 1-TC chips)."""
    cap = _vmem_capacity_bytes()
    budget = min(cap - (16 << 20), int(cap * 0.78))
    H0A = prep["w_cat"].shape[1]
    H1 = prep["w1"].shape[1]
    # per-batch-row VMEM: pipelined x tile + f32 intermediates (z, h) + output
    per_row = x_buffers * D * x_itemsize + 4 * (H0A + H1) + 2 * 4
    avail = budget - 2 * _resident_weight_bytes(prep)     # margin on resident weights
    tb = max(8, avail // per_row)
    tb = min(tb, 2048)                                    # per-step overhead amortized by here
    if B >= 256:
        tb = min(tb, pl.cdiv(B, 2))
    tb = min(tb, B)
    if tb >= 128:
        tb = (tb // 128) * 128
    else:
        tb = max(8, (tb // 8) * 8)
    return int(tb)


# --------------------------------------------------------------------------- #
# Wrapper
# --------------------------------------------------------------------------- #
def autoint_forward(feature_map, prep, *, batch_tile=None, x_buffers=2):
    """feature_map: [B, D].  Prefer bf16 (it is the dominant HBM stream); f32 is
    accepted and cast once in-kernel.  x_buffers=3 is the v5e knob if the input
    DMA shows up exposed in a profile."""
    B, D = feature_map.shape
    H0A = prep["w_cat"].shape[1]
    H0 = prep["w1"].shape[0]
    H1 = prep["w1"].shape[1]
    A = prep["wfc_row"].shape[1]

    x_itemsize = jnp.dtype(feature_map.dtype).itemsize
    tb = batch_tile if batch_tile is not None else _pick_batch_tile(
        B, D, prep, x_itemsize, max(2, x_buffers))

    # Ragged batches: cdiv grid + zero padding (sliced off after the call).
    grid_b = pl.cdiv(B, tb)
    Bp = grid_b * tb
    x = feature_map if Bp == B else jnp.pad(feature_map, ((0, Bp - B), (0, 0)))

    cap = _vmem_capacity_bytes()
    vmem_limit = int(max(32 << 20, min(cap - (8 << 20), 112 << 20)))

    operands = (x, prep["w_cat"], prep["b_cat"], prep["w1"], prep["b1"],
                prep["w2_row"], prep["wfc_row"], prep["bias"])

    def call(single_buffer_weights):
        def wspec(shape):
            # Resident weights: constant index_map -> never re-fetched; a single
            # buffer halves their VMEM footprint (buys larger batch tiles on v7x).
            if single_buffer_weights:
                return pl.BlockSpec(shape, lambda i: (0, 0),
                                    pipeline_mode=pl.Buffered(1))
            return pl.BlockSpec(shape, lambda i: (0, 0))

        if single_buffer_weights and x_buffers != 2:
            x_spec = pl.BlockSpec((tb, D), lambda i: (i, 0),
                                  pipeline_mode=pl.Buffered(x_buffers))
        else:
            x_spec = pl.BlockSpec((tb, D), lambda i: (i, 0))

        in_specs = [
            x_spec,                                  # feature_map, tiled over batch
            wspec((D, H0A)), wspec((1, H0A)),        # fused [w0 | Wv+Wres], [b0 | 0]
            wspec((H0, H1)), wspec((1, H1)),         # dnn layer 1
            wspec((1, H1)),                          # w2 row (dnn -> 1)
            wspec((1, A)),                           # fc row (attn -> 1)
            wspec((1, 1)),                           # b2 + bfc
        ]
        out_spec = pl.BlockSpec((tb, 1), lambda i: (i, 0))

        return pl.pallas_call(
            autoint_kernel,
            out_shape=jax.ShapeDtypeStruct((Bp, 1), jnp.float32),
            grid_spec=pltpu.PrefetchScalarGridSpec(
                num_scalar_prefetch=0,
                grid=(grid_b,),
                in_specs=in_specs,
                out_specs=out_spec,
            ),
            compiler_params=pltpu.CompilerParams(
                dimension_semantics=("parallel",),   # batch tiles are independent
                vmem_limit_bytes=vmem_limit,
            ),
        )(*operands)

    try:
        out = call(single_buffer_weights=True)
    except Exception:
        # Fallback for Pallas versions where Buffered(1) single-buffering is
        # rejected at lowering: default double-buffering is always valid.
        out = call(single_buffer_weights=False)

    return out[:B] if Bp != B else out


# --------------------------------------------------------------------------- #
# References
# --------------------------------------------------------------------------- #
def reference_forward(x, p, *, num_heads=1):
    """Pure f32 JAX reference mirroring the PyTorch forward literally
    (explicit Q/K/V attention with softmax over the length-1 head sequence)."""
    inv = lax.rsqrt(p["bn_var"] + BN_EPS)
    x_bn = (x - p["bn_mean"]) * inv * p["bn_gamma"] + p["bn_beta"]
    h = jnp.maximum(x_bn @ p["w0"] + p["b0"], 0.0)
    h = jnp.maximum(h @ p["w1"] + p["b1"], 0.0)
    dnn_out = h @ p["w2"] + p["b2"]

    B = x.shape[0]
    A = p["wv"].shape[1]
    dph = A // num_heads
    q = (x @ p["wq"]).reshape(B * num_heads, -1, dph)
    k = (x @ p["wk"]).reshape(B * num_heads, -1, dph)
    v = (x @ p["wv"]).reshape(B * num_heads, -1, dph)
    scores = jnp.einsum("bld,bmd->blm", q, k)          # use_scale=False
    attn = jax.nn.softmax(scores, axis=-1)             # length-1 axis -> all ones
    o = jnp.einsum("blm,bmd->bld", attn, v).reshape(B, A)
    res = x @ p["wres"]                                # input_dim != A -> W_res
    o = jnp.maximum(o + res, 0.0)                      # use_residual, ReLU, no LN
    att_fc = o @ p["wfc"] + p["bfc"]
    return jax.nn.sigmoid(att_fc + dnn_out)


def matched_reference(x, q):
    """Mirrors the kernel's exact numerics (fused/folded params, bf16 matmuls)."""
    cd = q["w_cat"].dtype
    xc = x.astype(cd)
    z = jnp.maximum(jnp.dot(xc, q["w_cat"], preferred_element_type=jnp.float32)
                    + q["b_cat"], 0.0)
    H0 = q["w1"].shape[0]
    h = jnp.maximum(jnp.dot(z[:, :H0].astype(cd), q["w1"],
                            preferred_element_type=jnp.float32) + q["b1"], 0.0)
    att = z[:, H0:]
    logits = (jnp.sum(h * q["w2_row"], axis=-1, keepdims=True)
              + jnp.sum(att * q["wfc_row"], axis=-1, keepdims=True)
              + q["bias"])
    return jax.nn.sigmoid(logits)


# --------------------------------------------------------------------------- #
# Parameter init (module-shaped, f32)
# --------------------------------------------------------------------------- #
def init_params(key, input_dim, hidden_units, attention_dim, num_heads):
    H0, H1 = hidden_units
    A = attention_dim * num_heads
    ks = jax.random.split(key, 16)
    n = jax.random.normal
    return {
        # sparse_bn (inference running stats + affine)
        "bn_gamma": 1.0 + 0.05 * n(ks[0], (1, input_dim), jnp.float32),
        "bn_beta":  0.05 * n(ks[1], (1, input_dim), jnp.float32),
        "bn_mean":  0.10 * n(ks[2], (1, input_dim), jnp.float32),
        "bn_var":   1.0 + 0.10 * jax.nn.sigmoid(n(ks[3], (1, input_dim), jnp.float32)),
        # DNN tower
        "w0": 0.05 * n(ks[4], (input_dim, H0), jnp.float32),
        "b0": 0.01 * n(ks[5], (1, H0), jnp.float32),
        "w1": 0.05 * n(ks[6], (H0, H1), jnp.float32),
        "b1": 0.01 * n(ks[7], (1, H1), jnp.float32),
        "w2": 0.05 * n(ks[8], (H1, 1), jnp.float32),
        "b2": 0.01 * n(ks[9], (1, 1), jnp.float32),
        # MultiHeadSelfAttention (layer 0), bias=False linears
        "wq":   0.05 * n(ks[10], (input_dim, A), jnp.float32),
        "wk":   0.05 * n(ks[11], (input_dim, A), jnp.float32),
        "wv":   0.05 * n(ks[12], (input_dim, A), jnp.float32),
        "wres": 0.05 * n(ks[13], (input_dim, A), jnp.float32),
        # final fc
        "wfc": 0.05 * n(ks[14], (A, 1), jnp.float32),
        "bfc": 0.01 * n(ks[15], (1, 1), jnp.float32),
    }


if __name__ == "__main__":
    key = jax.random.PRNGKey(0)
    k_x, k_p = jax.random.split(key)

    # small, module-consistent shapes
    batch = 300                                 # NOT a tile multiple: exercises cdiv + padding
    feature_count = 16
    embedding_dim = 10                          # module default
    input_dim = feature_count * embedding_dim   # 160
    hidden_units = (128, 64)                    # H0 multiple of 128 -> free in-kernel slice
    attention_dim = 8                           # module default
    num_heads = 1                               # module default

    params = init_params(k_p, input_dim, hidden_units, attention_dim, num_heads)
    # Upstream embedding-concat is assumed to emit the feature map in bf16
    # (dominant HBM stream); simulate that here instead of a wrapper-side cast.
    feature_map = jax.random.normal(k_x, (batch, input_dim), jnp.float32
                                    ).astype(jnp.bfloat16)

    prep = prepare_params(params, weights_dtype=jnp.bfloat16)
    out = autoint_forward(feature_map, prep)
    out = jax.block_until_ready(out)

    ref_matched = matched_reference(feature_map, prep)             # same numerics
    ref_f32 = reference_forward(feature_map.astype(jnp.float32), params,
                                num_heads=num_heads)

    assert out.shape == (batch, 1)
    assert bool(jnp.all(jnp.isfinite(out)))
    # kernel implements exactly the prepared (fused, folded, bf16-weight) computation
    assert bool(jnp.allclose(out, ref_matched, atol=1e-4, rtol=1e-4)), (out, ref_matched)
    # and stays close to the full-f32 module semantics (bf16 weight/activation slack)
    assert bool(jnp.allclose(out, ref_f32, atol=1e-2, rtol=0.0)), (out, ref_f32)

    print("KERNEL_OK")
</pallas_src>

<mosaic_0001>
module attributes {stable_mosaic.version = 11 : i64} {
  func.func @autoint_kernel(%arg0: i32, %arg1: memref<128x160xbf16, #tpu.memory_space<vmem>>, %arg2: memref<160x136xbf16, #tpu.memory_space<vmem>>, %arg3: memref<1x136xf32, #tpu.memory_space<vmem>>, %arg4: memref<128x64xbf16, #tpu.memory_space<vmem>>, %arg5: memref<1x64xf32, #tpu.memory_space<vmem>>, %arg6: memref<1x64xf32, #tpu.memory_space<vmem>>, %arg7: memref<1x8xf32, #tpu.memory_space<vmem>>, %arg8: memref<1x1xf32, #tpu.memory_space<vmem>>, %arg9: memref<128x1xf32, #tpu.memory_space<vmem>>) attributes {dimension_semantics = [#tpu.dimension_semantics<parallel>], iteration_bounds = array<i64: 3>, scalar_prefetch = 0 : i64, scratch_operands = 0 : i64, tpu.core_type = #tpu.core_type<tc>, window_params = [{transform_indices = @transform_0, window_bounds = array<i64: 128, 160>}, {pipeline_mode = #tpu.pipeline_mode<synchronous>, transform_indices = @transform_1, window_bounds = array<i64: 160, 136>}, {pipeline_mode = #tpu.pipeline_mode<synchronous>, transform_indices = @transform_2, window_bounds = array<i64: 1, 136>}, {pipeline_mode = #tpu.pipeline_mode<synchronous>, transform_indices = @transform_3, window_bounds = array<i64: 128, 64>}, {pipeline_mode = #tpu.pipeline_mode<synchronous>, transform_indices = @transform_4, window_bounds = array<i64: 1, 64>}, {pipeline_mode = #tpu.pipeline_mode<synchronous>, transform_indices = @transform_5, window_bounds = array<i64: 1, 64>}, {pipeline_mode = #tpu.pipeline_mode<synchronous>, transform_indices = @transform_6, window_bounds = array<i64: 1, 8>}, {pipeline_mode = #tpu.pipeline_mode<synchronous>, transform_indices = @transform_7, window_bounds = array<i64: 1, 1>}, {transform_indices = @transform_8, window_bounds = array<i64: 128, 1>}]} {
    %c0 = arith.constant 0 : index
    %c0_0 = arith.constant 0 : index
    %0 = vector.load %arg1[%c0, %c0_0] : memref<128x160xbf16, #tpu.memory_space<vmem>>, vector<128x160xbf16>
    %c0_1 = arith.constant 0 : index
    %c0_2 = arith.constant 0 : index
    %1 = vector.load %arg2[%c0_1, %c0_2] : memref<160x136xbf16, #tpu.memory_space<vmem>>, vector<160x136xbf16>
    %cst = arith.constant dense<0.000000e+00> : vector<128x136xf32>
    %2 = tpu.matmul %0, %1, %cst {dimension_numbers = #tpu.dot_dimension_numbers<[1], [0], [0], [1], [0, 0, 1, 1], [], []>} : vector<128x160xbf16>, vector<160x136xbf16>, vector<128x136xf32> -> vector<128x136xf32>
    %c0_3 = arith.constant 0 : index
    %c0_4 = arith.constant 0 : index
    %3 = vector.load %arg3[%c0_3, %c0_4] : memref<1x136xf32, #tpu.memory_space<vmem>>, vector<1x136xf32>
    %4 = vector.broadcast %3 : vector<1x136xf32> to vector<128x136xf32>
    %5 = arith.addf %2, %4 : vector<128x136xf32>
    %cst_5 = arith.constant 0.000000e+00 : f32
    %6 = vector.broadcast %cst_5 : f32 to vector<128x136xf32>
    %7 = arith.maximumf %5, %6 : vector<128x136xf32>
    %8 = vector.extract_strided_slice %7 {offsets = [0, 0], sizes = [128, 128], strides = [1, 1]} : vector<128x136xf32> to vector<128x128xf32>
    %9 = vector.extract_strided_slice %7 {offsets = [0, 128], sizes = [128, 8], strides = [1, 1]} : vector<128x136xf32> to vector<128x8xf32>
    %10 = arith.truncf %8 : vector<128x128xf32> to vector<128x128xbf16>
    %c0_6 = arith.constant 0 : index
    %c0_7 = arith.constant 0 : index
    %11 = vector.load %arg4[%c0_6, %c0_7] : memref<128x64xbf16, #tpu.memory_space<vmem>>, vector<128x64xbf16>
    %cst_8 = arith.constant dense<0.000000e+00> : vector<128x64xf32>
    %12 = tpu.matmul %10, %11, %cst_8 {dimension_numbers = #tpu.dot_dimension_numbers<[1], [0], [0], [1], [0, 0, 1, 1], [], []>} : vector<128x128xbf16>, vector<128x64xbf16>, vector<128x64xf32> -> vector<128x64xf32>
    %c0_9 = arith.constant 0 : index
    %c0_10 = arith.constant 0 : index
    %13 = vector.load %arg5[%c0_9, %c0_10] : memref<1x64xf32, #tpu.memory_space<vmem>>, vector<1x64xf32>
    %14 = vector.broadcast %13 : vector<1x64xf32> to vector<128x64xf32>
    %15 = arith.addf %12, %14 : vector<128x64xf32>
    %cst_11 = arith.constant 0.000000e+00 : f32
    %16 = vector.broadcast %cst_11 : f32 to vector<128x64xf32>
    %17 = arith.maximumf %15, %16 : vector<128x64xf32>
    %c0_12 = arith.constant 0 : index
    %c0_13 = arith.constant 0 : index
    %18 = vector.load %arg6[%c0_12, %c0_13] : memref<1x64xf32, #tpu.memory_space<vmem>>, vector<1x64xf32>
    %19 = vector.broadcast %18 : vector<1x64xf32> to vector<128x64xf32>
    %20 = arith.mulf %17, %19 : vector<128x64xf32>
    %cst_14 = arith.constant dense<0.000000e+00> : vector<128xf32>
    %21 = vector.multi_reduction <add>, %20, %cst_14 [1] : vector<128x64xf32> to vector<128xf32>
    %22 = vector.shape_cast %21 : vector<128xf32> to vector<128x1xf32>
    %c0_15 = arith.constant 0 : index
    %c0_16 = arith.constant 0 : index
    %23 = vector.load %arg7[%c0_15, %c0_16] : memref<1x8xf32, #tpu.memory_space<vmem>>, vector<1x8xf32>
    %24 = vector.broadcast %23 : vector<1x8xf32> to vector<128x8xf32>
    %25 = arith.mulf %9, %24 : vector<128x8xf32>
    %cst_17 = arith.constant dense<0.000000e+00> : vector<128xf32>
    %26 = vector.multi_reduction <add>, %25, %cst_17 [1] : vector<128x8xf32> to vector<128xf32>
    %27 = vector.shape_cast %26 : vector<128xf32> to vector<128x1xf32>
    %28 = arith.addf %22, %27 : vector<128x1xf32>
    %c0_18 = arith.constant 0 : index
    %c0_19 = arith.constant 0 : index
    %29 = vector.load %arg8[%c0_18, %c0_19] : memref<1x1xf32, #tpu.memory_space<vmem>>, vector<1x1xf32>
    %30 = vector.broadcast %29 : vector<1x1xf32> to vector<128x1xf32>
    %31 = arith.addf %28, %30 : vector<128x1xf32>
    %32 = arith.negf %31 : vector<128x1xf32>
    %33 = math.exp %32 : vector<128x1xf32>
    %cst_20 = arith.constant 1.000000e+00 : f32
    %34 = vector.broadcast %cst_20 : f32 to vector<128x1xf32>
    %35 = arith.addf %34, %33 : vector<128x1xf32>
    %36 = arith.divf %34, %35 : vector<128x1xf32>
    %c0_21 = arith.constant 0 : index
    %c0_22 = arith.constant 0 : index
    %37 = vector.load %arg9[%c0_21, %c0_22] : memref<128x1xf32, #tpu.memory_space<vmem>>, vector<128x1xf32>
    tpu.vector_store %arg9[%c0_21, %c0_22], %36 {strides = array<i32>} : memref<128x1xf32, #tpu.memory_space<vmem>>, vector<128x1xf32>,
    return
  }
  func.func @transform_0(%arg0: i32) -> (i32, i32) {
    %c0_i32 = arith.constant 0 : i32
    %c0_i32_0 = arith.constant 0 : i32
    return %arg0, %c0_i32 : i32, i32
  }
  func.func @transform_1(%arg0: i32) -> (i32, i32) {
    %c0_i32 = arith.constant 0 : i32
    %c0_i32_0 = arith.constant 0 : i32
    %c0_i32_1 = arith.constant 0 : i32
    return %c0_i32, %c0_i32_0 : i32, i32
  }
  func.func @transform_2(%arg0: i32) -> (i32, i32) {
    %c0_i32 = arith.constant 0 : i32
    %c0_i32_0 = arith.constant 0 : i32
    %c0_i32_1 = arith.constant 0 : i32
    return %c0_i32, %c0_i32_0 : i32, i32
  }
  func.func @transform_3(%arg0: i32) -> (i32, i32) {
    %c0_i32 = arith.constant 0 : i32
    %c0_i32_0 = arith.constant 0 : i32
    %c0_i32_1 = arith.constant 0 : i32
    return %c0_i32, %c0_i32_0 : i32, i32
  }
  func.func @transform_4(%arg0: i32) -> (i32, i32) {
    %c0_i32 = arith.constant 0 : i32
    %c0_i32_0 = arith.constant 0 : i32
    %c0_i32_1 = arith.constant 0 : i32
    return %c0_i32, %c0_i32_0 : i32, i32
  }
  func.func @transform_5(%arg0: i32) -> (i32, i32) {
    %c0_i32 = arith.constant 0 : i32
    %c0_i32_0 = arith.constant 0 : i32
    %c0_i32_1 = arith.constant 0 : i32
    return %c0_i32, %c0_i32_0 : i32, i32
  }
  func.func @transform_6(%arg0: i32) -> (i32, i32) {
    %c0_i32 = arith.constant 0 : i32
    %c0_i32_0 = arith.constant 0 : i32
    %c0_i32_1 = arith.constant 0 : i32
    return %c0_i32, %c0_i32_0 : i32, i32
  }
  func.func @transform_7(%arg0: i32) -> (i32, i32) {
    %c0_i32 = arith.constant 0 : i32
    %c0_i32_0 = arith.constant 0 : i32
    %c0_i32_1 = arith.constant 0 : i32
    return %c0_i32, %c0_i32_0 : i32, i32
  }
  func.func @transform_8(%arg0: i32) -> (i32, i32) {
    %c0_i32 = arith.constant 0 : i32
    %c0_i32_0 = arith.constant 0 : i32
    return %arg0, %c0_i32 : i32, i32
  }
}

module attributes {stable_mosaic.version = 11 : i64} {
  func.func @autoint_kernel(%arg0: i32, %arg1: memref<128x160xbf16, #tpu.memory_space<vmem>>, %arg2: memref<160x136xbf16, #tpu.memory_space<vmem>>, %arg3: memref<1x136xf32, #tpu.memory_space<vmem>>, %arg4: memref<128x64xbf16, #tpu.memory_space<vmem>>, %arg5: memref<1x64xf32, #tpu.memory_space<vmem>>, %arg6: memref<1x64xf32, #tpu.memory_space<vmem>>, %arg7: memref<1x8xf32, #tpu.memory_space<vmem>>, %arg8: memref<1x1xf32, #tpu.memory_space<vmem>>, %arg9: memref<128x1xf32, #tpu.memory_space<vmem>>) attributes {dimension_semantics = [#tpu.dimension_semantics<parallel>], iteration_bounds = array<i64: 3>, scalar_prefetch = 0 : i64, scratch_operands = 0 : i64, tpu.core_type = #tpu.core_type<tc>, window_params = [{transform_indices = @transform_0, window_bounds = array<i64: 128, 160>}, {pipeline_mode = #tpu.pipeline_mode<synchronous>, transform_indices = @transform_1, window_bounds = array<i64: 160, 136>}, {pipeline_mode = #tpu.pipeline_mode<synchronous>, transform_indices = @transform_2, window_bounds = array<i64: 1, 136>}, {pipeline_mode = #tpu.pipeline_mode<synchronous>, transform_indices = @transform_3, window_bounds = array<i64: 128, 64>}, {pipeline_mode = #tpu.pipeline_mode<synchronous>, transform_indices = @transform_4, window_bounds = array<i64: 1, 64>}, {pipeline_mode = #tpu.pipeline_mode<synchronous>, transform_indices = @transform_5, window_bounds = array<i64: 1, 64>}, {pipeline_mode = #tpu.pipeline_mode<synchronous>, transform_indices = @transform_6, window_bounds = array<i64: 1, 8>}, {pipeline_mode = #tpu.pipeline_mode<synchronous>, transform_indices = @transform_7, window_bounds = array<i64: 1, 1>}, {transform_indices = @transform_8, window_bounds = array<i64: 128, 1>}]} {
    %c0 = arith.constant 0 : index
    %c0_0 = arith.constant 0 : index
    %0 = vector.load %arg1[%c0, %c0_0] : memref<128x160xbf16, #tpu.memory_space<vmem>>, vector<128x160xbf16>
    %c0_1 = arith.constant 0 : index
    %c0_2 = arith.constant 0 : index
    %1 = vector.load %arg2[%c0_1, %c0_2] : memref<160x136xbf16, #tpu.memory_space<vmem>>, vector<160x136xbf16>
    %cst = arith.constant dense<0.000000e+00> : vector<128x136xf32>
    %2 = tpu.matmul %0, %1, %cst {dimension_numbers = #tpu.dot_dimension_numbers<[1], [0], [0], [1], [0, 0, 1, 1], [], []>} : vector<128x160xbf16>, vector<160x136xbf16>, vector<128x136xf32> -> vector<128x136xf32>
    %c0_3 = arith.constant 0 : index
    %c0_4 = arith.constant 0 : index
    %3 = vector.load %arg3[%c0_3, %c0_4] : memref<1x136xf32, #tpu.memory_space<vmem>>, vector<1x136xf32>
    %4 = vector.broadcast %3 : vector<1x136xf32> to vector<128x136xf32>
    %5 = arith.addf %2, %4 : vector<128x136xf32>
    %cst_5 = arith.constant 0.000000e+00 : f32
    %6 = vector.broadcast %cst_5 : f32 to vector<128x136xf32>
    %7 = arith.maximumf %5, %6 : vector<128x136xf32>
    %8 = vector.extract_strided_slice %7 {offsets = [0, 0], sizes = [128, 128], strides = [1, 1]} : vector<128x136xf32> to vector<128x128xf32>
    %9 = vector.extract_strided_slice %7 {offsets = [0, 128], sizes = [128, 8], strides = [1, 1]} : vector<128x136xf32> to vector<128x8xf32>
    %10 = arith.truncf %8 : vector<128x128xf32> to vector<128x128xbf16>
    %c0_6 = arith.constant 0 : index
    %c0_7 = arith.constant 0 : index
    %11 = vector.load %arg4[%c0_6, %c0_7] : memref<128x64xbf16, #tpu.memory_space<vmem>>, vector<128x64xbf16>
    %cst_8 = arith.constant dense<0.000000e+00> : vector<128x64xf32>
    %12 = tpu.matmul %10, %11, %cst_8 {dimension_numbers = #tpu.dot_dimension_numbers<[1], [0], [0], [1], [0, 0, 1, 1], [], []>} : vector<128x128xbf16>, vector<128x64xbf16>, vector<128x64xf32> -> vector<128x64xf32>
    %c0_9 = arith.constant 0 : index
    %c0_10 = arith.constant 0 : index
    %13 = vector.load %arg5[%c0_9, %c0_10] : memref<1x64xf32, #tpu.memory_space<vmem>>, vector<1x64xf32>
    %14 = vector.broadcast %13 : vector<1x64xf32> to vector<128x64xf32>
    %15 = arith.addf %12, %14 : vector<128x64xf32>
    %cst_11 = arith.constant 0.000000e+00 : f32
    %16 = vector.broadcast %cst_11 : f32 to vector<128x64xf32>
    %17 = arith.maximumf %15, %16 : vector<128x64xf32>
    %c0_12 = arith.constant 0 : index
    %c0_13 = arith.constant 0 : index
    %18 = vector.load %arg6[%c0_12, %c0_13] : memref<1x64xf32, #tpu.memory_space<vmem>>, vector<1x64xf32>
    %19 = vector.broadcast %18 : vector<1x64xf32> to vector<128x64xf32>
    %20 = arith.mulf %17, %19 : vector<128x64xf32>
    %cst_14 = arith.constant dense<0.000000e+00> : vector<128xf32>
    %21 = vector.multi_reduction <add>, %20, %cst_14 [1] : vector<128x64xf32> to vector<128xf32>
    %22 = vector.shape_cast %21 : vector<128xf32> to vector<128x1xf32>
    %c0_15 = arith.constant 0 : index
    %c0_16 = arith.constant 0 : index
    %23 = vector.load %arg7[%c0_15, %c0_16] : memref<1x8xf32, #tpu.memory_space<vmem>>, vector<1x8xf32>
    %24 = vector.broadcast %23 : vector<1x8xf32> to vector<128x8xf32>
    %25 = arith.mulf %9, %24 : vector<128x8xf32>
    %cst_17 = arith.constant dense<0.000000e+00> : vector<128xf32>
    %26 = vector.multi_reduction <add>, %25, %cst_17 [1] : vector<128x8xf32> to vector<128xf32>
    %27 = vector.shape_cast %26 : vector<128xf32> to vector<128x1xf32>
    %28 = arith.addf %22, %27 : vector<128x1xf32>
    %c0_18 = arith.constant 0 : index
    %c0_19 = arith.constant 0 : index
    %29 = vector.load %arg8[%c0_18, %c0_19] : memref<1x1xf32, #tpu.memory_space<vmem>>, vector<1x1xf32>
    %30 = vector.broadcast %29 : vector<1x1xf32> to vector<128x1xf32>
    %31 = arith.addf %28, %30 : vector<128x1xf32>
    %32 = arith.negf %31 : vector<128x1xf32>
    %33 = math.exp %32 : vector<128x1xf32>
    %cst_20 = arith.constant 1.000000e+00 : f32
    %34 = vector.broadcast %cst_20 : f32 to vector<128x1xf32>
    %35 = arith.addf %34, %33 : vector<128x1xf32>
    %36 = arith.divf %34, %35 : vector<128x1xf32>
    %c0_21 = arith.constant 0 : index
    %c0_22 = arith.constant 0 : index
    %37 = vector.load %arg9[%c0_21, %c0_22] : memref<128x1xf32, #tpu.memory_space<vmem>>, vector<128x1xf32>
    tpu.vector_store %arg9[%c0_21, %c0_22], %36 {strides = array<i32>} : memref<128x1xf32, #tpu.memory_space<vmem>>, vector<128x1xf32>,
    return
  }
  func.func @transform_0(%arg0: i32) -> (i32, i32) {
    %c0_i32 = arith.constant 0 : i32
    %c0_i32_0 = arith.constant 0 : i32
    return %arg0, %c0_i32 : i32, i32
  }
  func.func @transform_1(%arg0: i32) -> (i32, i32) {
    %c0_i32 = arith.constant 0 : i32
    %c0_i32_0 = arith.constant 0 : i32
    %c0_i32_1 = arith.constant 0 : i32
    return %c0_i32, %c0_i32_0 : i32, i32
  }
  func.func @transform_2(%arg0: i32) -> (i32, i32) {
    %c0_i32 = arith.constant 0 : i32
    %c0_i32_0 = arith.constant 0 : i32
    %c0_i32_1 = arith.constant 0 : i32
    return %c0_i32, %c0_i32_0 : i32, i32
  }
  func.func @transform_3(%arg0: i32) -> (i32, i32) {
    %c0_i32 = arith.constant 0 : i32
    %c0_i32_0 = arith.constant 0 : i32
    %c0_i32_1 = arith.constant 0 : i32
    return %c0_i32, %c0_i32_0 : i32, i32
  }
  func.func @transform_4(%arg0: i32) -> (i32, i32) {
    %c0_i32 = arith.constant 0 : i32
    %c0_i32_0 = arith.constant 0 : i32
    %c0_i32_1 = arith.constant 0 : i32
    return %c0_i32, %c0_i32_0 : i32, i32
  }
  func.func @transform_5(%arg0: i32) -> (i32, i32) {
    %c0_i32 = arith.constant 0 : i32
    %c0_i32_0 = arith.constant 0 : i32
    %c0_i32_1 = arith.constant 0 : i32
    return %c0_i32, %c0_i32_0 : i32, i32
  }
  func.func @transform_6(%arg0: i32) -> (i32, i32) {
    %c0_i32 = arith.constant 0 : i32
    %c0_i32_0 = arith.constant 0 : i32
    %c0_i32_1 = arith.constant 0 : i32
    return %c0_i32, %c0_i32_0 : i32, i32
  }
  func.func @transform_7(%arg0: i32) -> (i32, i32) {
    %c0_i32 = arith.constant 0 : i32
    %c0_i32_0 = arith.constant 0 : i32
    %c0_i32_1 = arith.constant 0 : i32
    return %c0_i32, %c0_i32_0 : i32, i32
  }
  func.func @transform_8(%arg0: i32) -> (i32, i32) {
    %c0_i32 = arith.constant 0 : i32
    %c0_i32_0 = arith.constant 0 : i32
    return %arg0, %c0_i32 : i32, i32
  }
}

</mosaic_0001>

<llo_original>
// kernel: tpu_custom_call.1
$region0: #{tpu_custom_call.1}
  #allocation0 [shape = 'u32[]', space=smem, size = 0x4, offset = 0x4, fixed_abs, tag = 'smem constant byte address 0x4 - core index']
  #allocation1 [shape = 'u32[144,128]{1,0:T(1,128)}', space=vmem, size = 0x12000, scoped, tag = 'internal scratch']
  #allocation2 [shape = 'f32[1,1]{1,0:T(1,128)S(1)}', space=vmem, size = 0x200, scoped, tag = 'scoped memory for tpu_custom_call.1']
  %s0 = inlined_call_operand.vmem [shape: bf16[384,160], index: 0, kind: input, shape index: {}]
  %s1 = inlined_call_operand.vmem [shape: bf16[160,136], index: 1, kind: input, shape index: {}]
  %s2 = inlined_call_operand.vmem [shape: f32[1,136], index: 2, kind: input, shape index: {}]
  %s3 = inlined_call_operand.vmem [shape: bf16[128,64], index: 3, kind: input, shape index: {}]
  %s4 = inlined_call_operand.vmem [shape: f32[1,64], index: 4, kind: input, shape index: {}]
  %s5 = inlined_call_operand.vmem [shape: f32[1,64], index: 5, kind: input, shape index: {}]
  %s6 = inlined_call_operand.vmem [shape: f32[1,8], index: 6, kind: input, shape index: {}]
  %s7 = inlined_call_operand.<no memory space> [shape: f32[1,1], index: 7, kind: input, shape index: {}]
  %s8 = inlined_call_operand.vmem [shape: f32[384,1], index: 8, kind: output, shape index: {}]
  %s9 = sld [smem:[#allocation0]]
  $region65: #{tpu_custom_call.1} parent=0
    _
  %s11 = ssub.s32 1, %s9
  %s12 = scalar_select 0, %s11, %s9
  %v13 = vstv %s7
  %14 = vst [vmem:[#allocation2] sm:$0x1] %v13
  loop: start=0, step=1, limit=5
  $region2: #{tpu_custom_call.1} parent=0 // loop_pre_header
    _
  $region3: #{tpu_custom_call.1} parent=0 // loop_header
    %s16 = sphi 0, %s20
    %p17 = scmp.ge.s32.totalorder %s16, 5
    %s26 = sphi 0, %s28
    %s29 = sphi 0, %s26
    %s30 = sphi 0, %s29
    %s46 = sphi 0, %s30
    %s50 = sphi 0, %s50
    %s52 = sphi 0, %s50
    %s53 = sphi 0, %s52
    %s67 = sphi 0, %s53
    %s71 = sphi 0, %s71
    %s73 = sphi 0, %s71
    %s74 = sphi 0, %s73
    %s88 = sphi 0, %s74
    %s92 = sphi 0, %s92
    %s94 = sphi 0, %s92
    %s95 = sphi 0, %s94
    %s109 = sphi 0, %s95
    %s113 = sphi 0, %s113
    %s115 = sphi 0, %s113
    %s116 = sphi 0, %s115
    %s130 = sphi 0, %s116
    %s134 = sphi 0, %s134
    %s136 = sphi 0, %s134
    %s137 = sphi 0, %s136
    %s151 = sphi 0, %s137
    %s155 = sphi 0, %s155
    %s157 = sphi 0, %s155
    %s158 = sphi 0, %s157
    %s172 = sphi 0, %s158
    %s176 = sphi 0, %s176
    %s178 = sphi 0, %s176
    %s179 = sphi 0, %s178
    %s193 = sphi 0, %s179
    %s199 = sphi 0, %s201
    %s202 = sphi 0, %s199
    %s203 = sphi 0, %s202
    %s219 = sphi 0, %s203
  $region4: #{tpu_custom_call.1} parent=0 // loop_header_branch
    %19 = sbr.rel (%p17) target = $region8
  $region5: #{tpu_custom_call.1} parent=0 // loop_body
    %s21 = ssub.s32 %s16, 1
    %s22 = ssub.s32 %s16, 2
    %s23 = sadd.s32 %s16, 1
    %s24 = ssub.s32 %s16, %s23
    %p25 = scmp.eq.s32.totalorder %s24, 0
    %s27 = sadd.s32 %s26, 1
    %s28 = scalar_select %p25, %s26, %s27
    %p31 = pneg %p25
    %p32 = scmp.eq.s32.totalorder %s16, 2
    %p33 = por %p31, %p32
    %p34 = scmp.ne.s32.totalorder %s26, %s29
    %p35 = scmp.eq.s32.totalorder %s16, 0
    %p36 = por %p34, %p35
    %p37 = scmp.ne.s32.totalorder %s26, %s29
    %p38 = scmp.eq.s32.totalorder %s21, 2
    %p39 = por %p37, %p38
    %p40 = scmp.ne.s32.totalorder %s29, %s30
    %p41 = scmp.eq.s32.totalorder %s21, 0
    %p42 = por %p40, %p41
    %p43 = scmp.ne.s32.totalorder %s29, %s30
    %p44 = scmp.eq.s32.totalorder %s22, 2
    %p45 = por %p43, %p44
    %p47 = scmp.ne.s32.totalorder %s30, %s46
    %p48 = scmp.eq.s32.totalorder %s22, 0
    %p49 = por %p47, %p48
    %s51 = sadd.s32 %s50, 1
    %p54 = scmp.eq.s32.totalorder %s16, 2
    %p55 = scmp.ne.s32.totalorder %s50, %s52
    %p56 = scmp.eq.s32.totalorder %s16, 0
    %p57 = por %p55, %p56
    %p58 = scmp.ne.s32.totalorder %s50, %s52
    %p59 = scmp.eq.s32.totalorder %s21, 2
    %p60 = por %p58, %p59
    %p61 = scmp.ne.s32.totalorder %s52, %s53
    %p62 = scmp.eq.s32.totalorder %s21, 0
    %p63 = por %p61, %p62
    %p64 = scmp.ne.s32.totalorder %s52, %s53
    %p65 = scmp.eq.s32.totalorder %s22, 2
    %p66 = por %p64, %p65
    %p68 = scmp.ne.s32.totalorder %s53, %s67
    %p69 = scmp.eq.s32.totalorder %s22, 0
    %p70 = por %p68, %p69
    %s72 = sadd.s32 %s71, 1
    %p75 = scmp.eq.s32.totalorder %s16, 2
    %p76 = scmp.ne.s32.totalorder %s71, %s73
    %p77 = scmp.eq.s32.totalorder %s16, 0
    %p78 = por %p76, %p77
    %p79 = scmp.ne.s32.totalorder %s71, %s73
    %p80 = scmp.eq.s32.totalorder %s21, 2
    %p81 = por %p79, %p80
    %p82 = scmp.ne.s32.totalorder %s73, %s74
    %p83 = scmp.eq.s32.totalorder %s21, 0
    %p84 = por %p82, %p83
    %p85 = scmp.ne.s32.totalorder %s73, %s74
    %p86 = scmp.eq.s32.totalorder %s22, 2
    %p87 = por %p85, %p86
    %p89 = scmp.ne.s32.totalorder %s74, %s88
    %p90 = scmp.eq.s32.totalorder %s22, 0
    %p91 = por %p89, %p90
    %s93 = sadd.s32 %s92, 1
    %p96 = scmp.eq.s32.totalorder %s16, 2
    %p97 = scmp.ne.s32.totalorder %s92, %s94
    %p98 = scmp.eq.s32.totalorder %s16, 0
    %p99 = por %p97, %p98
    %p100 = scmp.ne.s32.totalorder %s92, %s94
    %p101 = scmp.eq.s32.totalorder %s21, 2
    %p102 = por %p100, %p101
    %p103 = scmp.ne.s32.totalorder %s94, %s95
    %p104 = scmp.eq.s32.totalorder %s21, 0
    %p105 = por %p103, %p104
    %p106 = scmp.ne.s32.totalorder %s94, %s95
    %p107 = scmp.eq.s32.totalorder %s22, 2
    %p108 = por %p106, %p107
    %p110 = scmp.ne.s32.totalorder %s95, %s109
    %p111 = scmp.eq.s32.totalorder %s22, 0
    %p112 = por %p110, %p111
    %s114 = sadd.s32 %s113, 1
    %p117 = scmp.eq.s32.totalorder %s16, 2
    %p118 = scmp.ne.s32.totalorder %s113, %s115
    %p119 = scmp.eq.s32.totalorder %s16, 0
    %p120 = por %p118, %p119
    %p121 = scmp.ne.s32.totalorder %s113, %s115
    %p122 = scmp.eq.s32.totalorder %s21, 2
    %p123 = por %p121, %p122
    %p124 = scmp.ne.s32.totalorder %s115, %s116
    %p125 = scmp.eq.s32.totalorder %s21, 0
    %p126 = por %p124, %p125
    %p127 = scmp.ne.s32.totalorder %s115, %s116
    %p128 = scmp.eq.s32.totalorder %s22, 2
    %p129 = por %p127, %p128
    %p131 = scmp.ne.s32.totalorder %s116, %s130
    %p132 = scmp.eq.s32.totalorder %s22, 0
    %p133 = por %p131, %p132
    %s135 = sadd.s32 %s134, 1
    %p138 = scmp.eq.s32.totalorder %s16, 2
    %p139 = scmp.ne.s32.totalorder %s134, %s136
    %p140 = scmp.eq.s32.totalorder %s16, 0
    %p141 = por %p139, %p140
    %p142 = scmp.ne.s32.totalorder %s134, %s136
    %p143 = scmp.eq.s32.totalorder %s21, 2
    %p144 = por %p142, %p143
    %p145 = scmp.ne.s32.totalorder %s136, %s137
    %p146 = scmp.eq.s32.totalorder %s21, 0
    %p147 = por %p145, %p146
    %p148 = scmp.ne.s32.totalorder %s136, %s137
    %p149 = scmp.eq.s32.totalorder %s22, 2
    %p150 = por %p148, %p149
    %p152 = scmp.ne.s32.totalorder %s137, %s151
    %p153 = scmp.eq.s32.totalorder %s22, 0
    %p154 = por %p152, %p153
    %s156 = sadd.s32 %s155, 1
    %p159 = scmp.eq.s32.totalorder %s16, 2
    %p160 = scmp.ne.s32.totalorder %s155, %s157
    %p161 = scmp.eq.s32.totalorder %s16, 0
    %p162 = por %p160, %p161
    %p163 = scmp.ne.s32.totalorder %s155, %s157
    %p164 = scmp.eq.s32.totalorder %s21, 2
    %p165 = por %p163, %p164
    %p166 = scmp.ne.s32.totalorder %s157, %s158
    %p167 = scmp.eq.s32.totalorder %s21, 0
    %p168 = por %p166, %p167
    %p169 = scmp.ne.s32.totalorder %s157, %s158
    %p170 = scmp.eq.s32.totalorder %s22, 2
    %p171 = por %p169, %p170
    %p173 = scmp.ne.s32.totalorder %s158, %s172
    %p174 = scmp.eq.s32.totalorder %s22, 0
    %p175 = por %p173, %p174
    %s177 = sadd.s32 %s176, 1
    %p180 = scmp.eq.s32.totalorder %s16, 2
    %p181 = scmp.ne.s32.totalorder %s176, %s178
    %p182 = scmp.eq.s32.totalorder %s16, 0
    %p183 = por %p181, %p182
    %p184 = scmp.ne.s32.totalorder %s176, %s178
    %p185 = scmp.eq.s32.totalorder %s21, 2
    %p186 = por %p184, %p185
    %p187 = scmp.ne.s32.totalorder %s178, %s179
    %p188 = scmp.eq.s32.totalorder %s21, 0
    %p189 = por %p187, %p188
    %p190 = scmp.ne.s32.totalorder %s178, %s179
    %p191 = scmp.eq.s32.totalorder %s22, 2
    %p192 = por %p190, %p191
    %p194 = scmp.ne.s32.totalorder %s179, %s193
    %p195 = scmp.eq.s32.totalorder %s22, 0
    %p196 = por %p194, %p195
    %s197 = ssub.s32 %s16, %s23
    %p198 = scmp.eq.s32.totalorder %s197, 0
    %s200 = sadd.s32 %s199, 1
    %s201 = scalar_select %p198, %s199, %s200
    %p204 = pneg %p198
    %p205 = scmp.eq.s32.totalorder %s16, 2
    %p206 = por %p204, %p205
    %p207 = scmp.ne.s32.totalorder %s199, %s202
    %p208 = scmp.eq.s32.totalorder %s16, 0
    %p209 = por %p207, %p208
    %p210 = scmp.ne.s32.totalorder %s199, %s202
    %p211 = scmp.eq.s32.totalorder %s21, 2
    %p212 = por %p210, %p211
    %p213 = scmp.ne.s32.totalorder %s202, %s203
    %p214 = scmp.eq.s32.totalorder %s21, 0
    %p215 = por %p213, %p214
    %p216 = scmp.ne.s32.totalorder %s202, %s203
    %p217 = scmp.eq.s32.totalorder %s22, 2
    %p218 = por %p216, %p217
    %p220 = scmp.ne.s32.totalorder %s203, %s219
    %p221 = scmp.eq.s32.totalorder %s22, 0
    %p222 = por %p220, %p221
    %p223 = scmp.le.s32.totalorder 1, %s16
    %p224 = scmp.lt.s32.totalorder %s16, 4
    %p225 = pnand %p223, %p224
    %p226 = pneg %p225
    // Predicated region
    $region9: #{tpu_custom_call.1} parent=5 // pred_check
      _
    $region10: #{tpu_custom_call.1} parent=5 // pred_check_branch
      %228 = sbr.rel (%p225) target = $region12
    $region11: #{tpu_custom_call.1} parent=5 // pred_region
      %s229 = ssub.s32 %s16, 1
      // Predicated region
      $region13: #{tpu_custom_call.1} parent=11 // pred_check
        %p230 = pneg %p63
      $region14: #{tpu_custom_call.1} parent=11 // pred_check_branch
        %232 = sbr.rel (%p230) target = $region16
      $region15: #{tpu_custom_call.1} parent=11 // pred_region
        _
      $region16: #{tpu_custom_call.1} parent=11 // pred_fallthru
        _
      // Predicated region
      $region17: #{tpu_custom_call.1} parent=11 // pred_check
        %p233 = pneg %p84
      $region18: #{tpu_custom_call.1} parent=11 // pred_check_branch
        %235 = sbr.rel (%p233) target = $region20
      $region19: #{tpu_custom_call.1} parent=11 // pred_region
        _
      $region20: #{tpu_custom_call.1} parent=11 // pred_fallthru
        _
      // Predicated region
      $region21: #{tpu_custom_call.1} parent=11 // pred_check
        %p236 = pneg %p105
      $region22: #{tpu_custom_call.1} parent=11 // pred_check_branch
        %238 = sbr.rel (%p236) target = $region24
      $region23: #{tpu_custom_call.1} parent=11 // pred_region
        _
      $region24: #{tpu_custom_call.1} parent=11 // pred_fallthru
        _
      // Predicated region
      $region25: #{tpu_custom_call.1} parent=11 // pred_check
        %p239 = pneg %p126
      $region26: #{tpu_custom_call.1} parent=11 // pred_check_branch
        %241 = sbr.rel (%p239) target = $region28
      $region27: #{tpu_custom_call.1} parent=11 // pred_region
        _
      $region28: #{tpu_custom_call.1} parent=11 // pred_fallthru
        _
      // Predicated region
      $region29: #{tpu_custom_call.1} parent=11 // pred_check
        %p242 = pneg %p147
      $region30: #{tpu_custom_call.1} parent=11 // pred_check_branch
        %244 = sbr.rel (%p242) target = $region32
      $region31: #{tpu_custom_call.1} parent=11 // pred_region
        _
      $region32: #{tpu_custom_call.1} parent=11 // pred_fallthru
        _
      // Predicated region
      $region33: #{tpu_custom_call.1} parent=11 // pred_check
        %p245 = pneg %p168
      $region34: #{tpu_custom_call.1} parent=11 // pred_check_branch
        %247 = sbr.rel (%p245) target = $region36
      $region35: #{tpu_custom_call.1} parent=11 // pred_region
        _
      $region36: #{tpu_custom_call.1} parent=11 // pred_fallthru
        _
      // Predicated region
      $region37: #{tpu_custom_call.1} parent=11 // pred_check
        %p248 = pneg %p189
      $region38: #{tpu_custom_call.1} parent=11 // pred_check_branch
        %250 = sbr.rel (%p248) target = $region40
      $region39: #{tpu_custom_call.1} parent=11 // pred_region
        _
      $region40: #{tpu_custom_call.1} parent=11 // pred_fallthru
        _
    $region12: #{tpu_custom_call.1} parent=5 // pred_fallthru
      _
    %p251 = scmp.lt.s32.totalorder %s16, 3
    // Predicated region
    $region41: #{tpu_custom_call.1} parent=5 // pred_check
      %p252 = pneg %p251
    $region42: #{tpu_custom_call.1} parent=5 // pred_check_branch
      %254 = sbr.rel (%p252) target = $region44
    $region43: #{tpu_custom_call.1} parent=5 // pred_region
      // Predicated region
      $region45: #{tpu_custom_call.1} parent=43 // pred_check
        %p255 = pneg %p36
      $region46: #{tpu_custom_call.1} parent=43 // pred_check_branch
        %257 = sbr.rel (%p255) target = $region48
      $region47: #{tpu_custom_call.1} parent=43 // pred_region
        %s258 = smul.u32 16, %s16
        %p259 = scmp.lt.s32.totalorder %s258, 47
        %s260 = scalar_select %p259, %s258, 47
        %s261 = smul.addr %s260, 2
        %s262 = smul.addr %s261, 4
        %s263 = scalar_lea.vmem %s0, %s262
        %s264 = smul.u32 16, %s16
      $region48: #{tpu_custom_call.1} parent=43 // pred_fallthru
        _
    $region44: #{tpu_custom_call.1} parent=5 // pred_fallthru
      _
    %p265 = scmp.le.s32.totalorder 1, %s16
    %p266 = scmp.lt.s32.totalorder %s16, 4
    %p267 = pnand %p265, %p266
    %p268 = pneg %p267
    // Predicated region
    $region49: #{tpu_custom_call.1} parent=5 // pred_check
      _
    $region50: #{tpu_custom_call.1} parent=5 // pred_check_branch
      %270 = sbr.rel (%p267) target = $region52
    $region51: #{tpu_custom_call.1} parent=5 // pred_region
      %s271 = ssub.s32 %s16, 1
      %s272 = smul.u32 16, %s21
      %p273 = scmp.lt.s32.totalorder %s272, 47
      %s274 = scalar_select %p273, %s272, 47
      %s275 = smul.addr %s274, 2
      %s276 = smul.addr %s275, 4
      %s277 = scalar_lea.vmem %s0, %s276
      %p278 = pneg %p42
      %p279 = pneg %p39
      %p280 = pneg %p63
      %p281 = pneg %p60
      %p282 = pneg %p84
      %p283 = pneg %p81
      %p284 = pneg %p105
      %p285 = pneg %p102
      %p286 = pneg %p126
      %p287 = pneg %p123
      %p288 = pneg %p147
      %p289 = pneg %p144
      %p290 = pneg %p168
      %p291 = pneg %p165
      %p292 = pneg %p189
      %p293 = pneg %p186
      %p294 = pneg %p215
      %p295 = pneg %p212
      %s296 = smul.u32 16, %s21
      %p297 = scmp.lt.s32.totalorder %s296, 47
      %s298 = scalar_select %p297, %s296, 47
      %s299 = smul.addr %s298, 8
      %s300 = scalar_lea.vmem %s8, %s299
      %s301 = smul.u32 16, %s21
      %p302 = scmp.lt.s32.totalorder %s301, 47
      %s303 = scalar_select %p302, %s301, 47
      %s304 = smul.addr %s303, 2
      %s305 = smul.addr %s304, 4
      %s306 = scalar_lea.vmem %s0, %s305
      %s307 = smul.u32 16, %s21
      %s308 = smul.u32 16, %s21
      %p309 = scmp.lt.s32.totalorder %s308, 47
      %s310 = scalar_select %p309, %s308, 47
      %s311 = smul.addr %s310, 8
      %s312 = scalar_lea.vmem %s8, %s311
      %s313 = smul.u32 16, %s21
      %v315 = vld [vmem:[%s306] sm:$0xff]
      %v316 = vld [vmem:[%s306 + $0x8] sm:$0xff]
      %v317 = vld [vmem:[%s306 + $0x10] sm:$0xff]
      %v318 = vld [vmem:[%s306 + $0x18] sm:$0xff]
      %v319 = vld [vmem:[%s306 + $0x20] sm:$0xff]
      %v320 = vld [vmem:[%s306 + $0x28] sm:$0xff]
      %v321 = vld [vmem:[%s306 + $0x30] sm:$0xff]
      %v322 = vld [vmem:[%s306 + $0x38] sm:$0xff]
      %v323 = vld [vmem:[%s306 + $0x40] sm:$0xff]
      %v324 = vld [vmem:[%s306 + $0x48] sm:$0xff]
      %v325 = vld [vmem:[%s306 + $0x50] sm:$0xff]
      %v326 = vld [vmem:[%s306 + $0x58] sm:$0xff]
      %v327 = vld [vmem:[%s306 + $0x60] sm:$0xff]
      %v328 = vld [vmem:[%s306 + $0x68] sm:$0xff]
      %v329 = vld [vmem:[%s306 + $0x70] sm:$0xff]
      %v330 = vld [vmem:[%s306 + $0x78] sm:$0xff]
      %v331 = vld [vmem:[%s1] sm:$0xff]
      %v332 = vld [vmem:[%s1 + $0x8] sm:$0xff]
      %v333 = vld [vmem:[%s1 + $0x10] sm:$0xff]
      %v334 = vld [vmem:[%s1 + $0x18] sm:$0xff]
      %v335 = vld [vmem:[%s1 + $0x20] sm:$0xff]
      %v336 = vld [vmem:[%s1 + $0x28] sm:$0xff]
      %v337 = vld [vmem:[%s1 + $0x30] sm:$0xff]
      %v338 = vld [vmem:[%s1 + $0x38] sm:$0xff]
      %v339 = vld [vmem:[%s1 + $0x40] sm:$0xff]
      %v340 = vld [vmem:[%s1 + $0x48] sm:$0xff]
      %v341 = vld [vmem:[%s1 + $0x50] sm:$0xff]
      %v342 = vld [vmem:[%s1 + $0x58] sm:$0xff]
      %v343 = vld [vmem:[%s1 + $0x60] sm:$0xff]
      %v344 = vld [vmem:[%s1 + $0x68] sm:$0xff]
      %v345 = vld [vmem:[%s1 + $0x70] sm:$0xff]
      %v346 = vld [vmem:[%s1 + $0x78] sm:$0xff]
      %v347 = vld [vmem:[%s1 + $0x80] sm:$0xff]
      %v348 = vld [vmem:[%s1 + $0x88] sm:$0xff]
      %v349 = vld [vmem:[%s1 + $0x90] sm:$0xff]
      %v350 = vld [vmem:[%s1 + $0x98] sm:$0xff]
      %v351 = vld [vmem:[%s2] sm:$0x3]
      %v353 = vlaneseq
      %v354 = vshrl.u32 %v353, 7
      %v355 = vsub.s32 0, %v354
      %v356 = vrot.slane %v351, %v355
      %v357 = vlaneseq
      %v358 = vshrl.u32 %v357, 7
      %v359 = vsub.s32 1, %v358
      %v360 = vrot.slane %v351, %v359
      %v379 = vunpack.c.l.b16 %v315
      %v380 = vunpack.c.h.b16 %v315
      %v381 = vunpack.c.l.b16 %v316
      %v382 = vunpack.c.h.b16 %v316
      %v383 = vunpack.c.l.b16 %v317
      %v384 = vunpack.c.h.b16 %v317
      %v385 = vunpack.c.l.b16 %v318
      %v386 = vunpack.c.h.b16 %v318
      %v387 = vunpack.c.l.b16 %v319
      %v388 = vunpack.c.h.b16 %v319
      %v389 = vunpack.c.l.b16 %v320
      %v390 = vunpack.c.h.b16 %v320
      %v391 = vunpack.c.l.b16 %v321
      %v392 = vunpack.c.h.b16 %v321
      %v393 = vunpack.c.l.b16 %v322
      %v394 = vunpack.c.h.b16 %v322
      %v395 = vunpack.c.l.b16 %v323
      %v396 = vunpack.c.h.b16 %v323
      %v397 = vunpack.c.l.b16 %v324
      %v398 = vunpack.c.h.b16 %v324
      %v399 = vunpack.c.l.b16 %v325
      %v400 = vunpack.c.h.b16 %v325
      %v401 = vunpack.c.l.b16 %v326
      %v402 = vunpack.c.h.b16 %v326
      %v403 = vunpack.c.l.b16 %v327
      %v404 = vunpack.c.h.b16 %v327
      %v405 = vunpack.c.l.b16 %v328
      %v406 = vunpack.c.h.b16 %v328
      %v407 = vunpack.c.l.b16 %v329
      %v408 = vunpack.c.h.b16 %v329
      %v409 = vunpack.c.l.b16 %v330
      %v410 = vunpack.c.h.b16 %v330
      %v411 = vpack.c.b16 %v381, %v379
      %v412 = vpack.c.b16 %v382, %v380
      %v413 = vpack.c.b16 %v385, %v383
      %v414 = vpack.c.b16 %v386, %v384
      %v415 = vpack.c.b16 %v389, %v387
      %v416 = vpack.c.b16 %v390, %v388
      %v417 = vpack.c.b16 %v393, %v391
      %v418 = vpack.c.b16 %v394, %v392
      %v419 = vpack.c.b16 %v397, %v395
      %v420 = vpack.c.b16 %v398, %v396
      %v421 = vpack.c.b16 %v401, %v399
      %v422 = vpack.c.b16 %v402, %v400
      %v423 = vpack.c.b16 %v405, %v403
      %v424 = vpack.c.b16 %v406, %v404
      %v425 = vpack.c.b16 %v409, %v407
      %v426 = vpack.c.b16 %v410, %v408
      %v455 = vunpack.c.l.b16 %v331
      %v456 = vunpack.c.h.b16 %v331
      %v457 = vunpack.c.l.b16 %v332
      %v458 = vunpack.c.h.b16 %v332
      %v459 = vunpack.c.l.b16 %v333
      %v460 = vunpack.c.h.b16 %v333
      %v461 = vunpack.c.l.b16 %v334
      %v462 = vunpack.c.h.b16 %v334
      %v463 = vunpack.c.l.b16 %v335
      %v464 = vunpack.c.h.b16 %v335
      %v465 = vunpack.c.l.b16 %v336
      %v466 = vunpack.c.h.b16 %v336
      %v467 = vunpack.c.l.b16 %v337
      %v468 = vunpack.c.h.b16 %v337
      %v469 = vunpack.c.l.b16 %v338
      %v470 = vunpack.c.h.b16 %v338
      %v471 = vunpack.c.l.b16 %v339
      %v472 = vunpack.c.h.b16 %v339
      %v473 = vunpack.c.l.b16 %v340
      %v474 = vunpack.c.h.b16 %v340
      %v475 = vunpack.c.l.b16 %v341
      %v476 = vunpack.c.h.b16 %v341
      %v477 = vunpack.c.l.b16 %v342
      %v478 = vunpack.c.h.b16 %v342
      %v479 = vunpack.c.l.b16 %v343
      %v480 = vunpack.c.h.b16 %v343
      %v481 = vunpack.c.l.b16 %v344
      %v482 = vunpack.c.h.b16 %v344
      %v483 = vunpack.c.l.b16 %v345
      %v484 = vunpack.c.h.b16 %v345
      %v485 = vunpack.c.l.b16 %v346
      %v486 = vunpack.c.h.b16 %v346
      %v487 = vunpack.c.l.b16 %v347
      %v488 = vunpack.c.h.b16 %v347
      %v489 = vunpack.c.l.b16 %v348
      %v490 = vunpack.c.h.b16 %v348
      %v491 = vunpack.c.l.b16 %v349
      %v492 = vunpack.c.h.b16 %v349
      %v493 = vunpack.c.l.b16 %v350
      %v494 = vunpack.c.h.b16 %v350
      %v495 = vpack.c.b16 %v457, %v455
      %v496 = vpack.c.b16 %v458, %v456
      %v497 = vpack.c.b16 %v461, %v459
      %v498 = vpack.c.b16 %v462, %v460
      %v499 = vpack.c.b16 %v465, %v463
      %v500 = vpack.c.b16 %v466, %v464
      %v501 = vpack.c.b16 %v469, %v467
      %v502 = vpack.c.b16 %v470, %v468
      %v503 = vpack.c.b16 %v473, %v471
      %v504 = vpack.c.b16 %v474, %v472
      %v505 = vpack.c.b16 %v477, %v475
      %v506 = vpack.c.b16 %v478, %v476
      %v507 = vpack.c.b16 %v481, %v479
      %v508 = vpack.c.b16 %v482, %v480
      %v509 = vpack.c.b16 %v485, %v483
      %v510 = vpack.c.b16 %v486, %v484
      %v511 = vpack.c.b16 %v489, %v487
      %v512 = vpack.c.b16 %v490, %v488
      %v513 = vpack.c.b16 %v493, %v491
      %v514 = vpack.c.b16 %v494, %v492
      %vm535 = vcmask 261120
      %v537 = vsel %vm535, %v412, 0
      %v540 = vsel %vm535, %v414, 0
      %v543 = vsel %vm535, %v416, 0
      %v546 = vsel %vm535, %v418, 0
      %v549 = vsel %vm535, %v420, 0
      %v552 = vsel %vm535, %v422, 0
      %v555 = vsel %vm535, %v424, 0
      %v558 = vsel %vm535, %v426, 0
      %560 = vmatprep.subr.bf16.mxu0 %v510
      %561 = vmatpush1.bf16.msra.mxu0 %v509
      %562 = vmatprep.subr.bf16.mxu0 %v508
      %563 = vmatpush1.bf16.msra.mxu0 %v507
      %564 = vmatprep.subr.bf16.mxu0 %v506
      %565 = vmatpush1.bf16.msra.mxu0 %v505
      %566 = vmatprep.subr.bf16.mxu0 %v504
      %567 = vmatpush1.bf16.msra.mxu0 %v503
      %568 = vmatprep.subr.bf16.mxu0 %v502
      %569 = vmatpush1.bf16.msra.mxu0 %v501
      %570 = vmatprep.subr.bf16.mxu0 %v500
      %571 = vmatpush1.bf16.msra.mxu0 %v499
      %572 = vmatprep.subr.bf16.mxu0 %v498
      %573 = vmatpush1.bf16.msra.mxu0 %v497
      %574 = vmatprep.subr.bf16.mxu0 %v496
      %575 = vmatpush1.bf16.msra.mxu0 %v495
      %576 = vmatprep.subr.bf16.mxu0 0
      %577 = vmatpush2.bf16.msra.mxu0 0
      %578 = vmatprep.subr.bf16.mxu0 0
      %579 = vmatpush2.bf16.msra.mxu0 0
      %580 = vmatprep.subr.bf16.mxu0 0
      %581 = vmatpush2.bf16.msra.mxu0 0
      %582 = vmatprep.subr.bf16.mxu0 0
      %583 = vmatpush2.bf16.msra.mxu0 0
      %584 = vmatprep.subr.bf16.mxu0 0
      %585 = vmatpush2.bf16.msra.mxu0 0
      %586 = vmatprep.subr.bf16.mxu0 0
      %587 = vmatpush2.bf16.msra.mxu0 0
      %588 = vmatprep.subr.bf16.mxu0 %v514
      %589 = vmatpush2.bf16.msra.mxu0 %v513
      %590 = vmatprep.subr.bf16.mxu0 %v512
      %591 = vmatpush2.bf16.msra.mxu0 %v511
      %592 = vmatprep.mubr.bf16.mxu0 %v537
      %593 = vmatmul.mubr.bf16.gmra.mxu0 %v411
      %v594 = vpop.f32.mrf.mxu0
      %v595 = vadd.f32 %v356, %v594
      %v596 = vpop.f32.mrf.mxu0
      %v597 = vadd.f32 %v360, %v596
      %v598 = vpop.f32.mrf.mxu0
      %v599 = vadd.f32 %v356, %v598
      %v600 = vpop.f32.mrf.mxu0
      %v601 = vadd.f32 %v360, %v600
      %602 = vmatprep.mubr.bf16.mxu0 %v540
      %603 = vmatmul.mubr.bf16.gmra.mxu0 %v413
      %v604 = vpop.f32.mrf.mxu0
      %v605 = vadd.f32 %v356, %v604
      %v606 = vpop.f32.mrf.mxu0
      %v607 = vadd.f32 %v360, %v606
      %v608 = vpop.f32.mrf.mxu0
      %v609 = vadd.f32 %v356, %v608
      %v610 = vpop.f32.mrf.mxu0
      %v611 = vadd.f32 %v360, %v610
      %612 = vmatprep.mubr.bf16.mxu0 %v543
      %613 = vmatmul.mubr.bf16.gmra.mxu0 %v415
      %v614 = vpop.f32.mrf.mxu0
      %v615 = vadd.f32 %v356, %v614
      %v616 = vpop.f32.mrf.mxu0
      %v617 = vadd.f32 %v360, %v616
      %v618 = vpop.f32.mrf.mxu0
      %v619 = vadd.f32 %v356, %v618
      %v620 = vpop.f32.mrf.mxu0
      %v621 = vadd.f32 %v360, %v620
      %622 = vmatprep.mubr.bf16.mxu0 %v546
      %623 = vmatmul.mubr.bf16.gmra.mxu0 %v417
      %v624 = vpop.f32.mrf.mxu0
      %v625 = vadd.f32 %v356, %v624
      %v626 = vpop.f32.mrf.mxu0
      %v627 = vadd.f32 %v360, %v626
      %v628 = vpop.f32.mrf.mxu0
      %v629 = vadd.f32 %v356, %v628
      %v630 = vpop.f32.mrf.mxu0
      %v631 = vadd.f32 %v360, %v630
      %632 = vmatprep.mubr.bf16.mxu0 %v549
      %633 = vmatmul.mubr.bf16.gmra.mxu0 %v419
      %v634 = vpop.f32.mrf.mxu0
      %v635 = vadd.f32 %v356, %v634
      %v636 = vpop.f32.mrf.mxu0
      %v637 = vadd.f32 %v360, %v636
      %v638 = vpop.f32.mrf.mxu0
      %v639 = vadd.f32 %v356, %v638
      %v640 = vpop.f32.mrf.mxu0
      %v641 = vadd.f32 %v360, %v640
      %642 = vmatprep.mubr.bf16.mxu0 %v552
      %643 = vmatmul.mubr.bf16.gmra.mxu0 %v421
      %v644 = vpop.f32.mrf.mxu0
      %v645 = vadd.f32 %v356, %v644
      %v646 = vpop.f32.mrf.mxu0
      %v647 = vadd.f32 %v360, %v646
      %v648 = vpop.f32.mrf.mxu0
      %v649 = vadd.f32 %v356, %v648
      %v650 = vpop.f32.mrf.mxu0
      %v651 = vadd.f32 %v360, %v650
      %652 = vmatprep.mubr.bf16.mxu0 %v555
      %653 = vmatmul.mubr.bf16.gmra.mxu0 %v423
      %v654 = vpop.f32.mrf.mxu0
      %v655 = vadd.f32 %v356, %v654
      %v656 = vpop.f32.mrf.mxu0
      %v657 = vadd.f32 %v360, %v656
      %v658 = vpop.f32.mrf.mxu0
      %v659 = vadd.f32 %v356, %v658
      %v660 = vpop.f32.mrf.mxu0
      %v661 = vadd.f32 %v360, %v660
      %662 = vmatprep.mubr.bf16.mxu0 %v558
      %663 = vmatmul.mubr.bf16.gmra.mxu0 %v425
      %v664 = vpop.f32.mrf.mxu0
      %v665 = vadd.f32 %v356, %v664
      %v666 = vpop.f32.mrf.mxu0
      %v667 = vadd.f32 %v360, %v666
      %v668 = vpop.f32.mrf.mxu0
      %v669 = vadd.f32 %v356, %v668
      %v670 = vpop.f32.mrf.mxu0
      %v671 = vadd.f32 %v360, %v670
      %672 = vdwg.mxu0
      %v673 = vmax.f32 %v595, 0.0
      %v674 = vmax.f32 %v597, 0.0
      %v675 = vmax.f32 %v599, 0.0
      %v676 = vmax.f32 %v601, 0.0
      %v677 = vmax.f32 %v605, 0.0
      %v678 = vmax.f32 %v607, 0.0
      %v679 = vmax.f32 %v609, 0.0
      %v680 = vmax.f32 %v611, 0.0
      %v681 = vmax.f32 %v615, 0.0
      %v682 = vmax.f32 %v617, 0.0
      %v683 = vmax.f32 %v619, 0.0
      %v684 = vmax.f32 %v621, 0.0
      %v685 = vmax.f32 %v625, 0.0
      %v686 = vmax.f32 %v627, 0.0
      %v687 = vmax.f32 %v629, 0.0
      %v688 = vmax.f32 %v631, 0.0
      %v689 = vmax.f32 %v635, 0.0
      %v690 = vmax.f32 %v637, 0.0
      %v691 = vmax.f32 %v639, 0.0
      %v692 = vmax.f32 %v641, 0.0
      %v693 = vmax.f32 %v645, 0.0
      %v694 = vmax.f32 %v647, 0.0
      %v695 = vmax.f32 %v649, 0.0
      %v696 = vmax.f32 %v651, 0.0
      %v697 = vmax.f32 %v655, 0.0
      %v698 = vmax.f32 %v657, 0.0
      %v699 = vmax.f32 %v659, 0.0
      %v700 = vmax.f32 %v661, 0.0
      %v701 = vmax.f32 %v665, 0.0
      %v702 = vmax.f32 %v667, 0.0
      %v703 = vmax.f32 %v669, 0.0
      %v704 = vmax.f32 %v671, 0.0
      %v705 = vpack.c.bf16 %v675, %v673
      %v706 = vpack.c.bf16 %v679, %v677
      %v707 = vpack.c.bf16 %v683, %v681
      %v708 = vpack.c.bf16 %v687, %v685
      %v709 = vpack.c.bf16 %v691, %v689
      %v710 = vpack.c.bf16 %v695, %v693
      %v711 = vpack.c.bf16 %v699, %v697
      %v712 = vpack.c.bf16 %v703, %v701
      %v713 = vld [vmem:[%s3] sm:$0xf]
      %v714 = vld [vmem:[%s3 + $0x4] sm:$0xf]
      %v715 = vld [vmem:[%s3 + $0x8] sm:$0xf]
      %v716 = vld [vmem:[%s3 + $0xc] sm:$0xf]
      %v717 = vld [vmem:[%s3 + $0x10] sm:$0xf]
      %v718 = vld [vmem:[%s3 + $0x14] sm:$0xf]
      %v719 = vld [vmem:[%s3 + $0x18] sm:$0xf]
      %v720 = vld [vmem:[%s3 + $0x1c] sm:$0xf]
      %v721 = vld [vmem:[%s3 + $0x20] sm:$0xf]
      %v722 = vld [vmem:[%s3 + $0x24] sm:$0xf]
      %v723 = vld [vmem:[%s3 + $0x28] sm:$0xf]
      %v724 = vld [vmem:[%s3 + $0x2c] sm:$0xf]
      %v725 = vld [vmem:[%s3 + $0x30] sm:$0xf]
      %v726 = vld [vmem:[%s3 + $0x34] sm:$0xf]
      %v727 = vld [vmem:[%s3 + $0x38] sm:$0xf]
      %v728 = vld [vmem:[%s3 + $0x3c] sm:$0xf]
      %v729 = vld [vmem:[%s4] sm:$0x1]
      %v731 = vlaneseq
      %v732 = vshrl.u32 %v731, 7
      %v733 = vsub.s32 0, %v732
      %v734 = vrot.slane %v729, %v733
      %v752 = vunpack.c.l.b16 %v713
      %v753 = vunpack.c.l.b16 %v714
      %v754 = vunpack.c.l.b16 %v715
      %v755 = vunpack.c.l.b16 %v716
      %v756 = vunpack.c.l.b16 %v717
      %v757 = vunpack.c.l.b16 %v718
      %v758 = vunpack.c.l.b16 %v719
      %v759 = vunpack.c.l.b16 %v720
      %v760 = vunpack.c.l.b16 %v721
      %v761 = vunpack.c.l.b16 %v722
      %v762 = vunpack.c.l.b16 %v723
      %v763 = vunpack.c.l.b16 %v724
      %v764 = vunpack.c.l.b16 %v725
      %v765 = vunpack.c.l.b16 %v726
      %v766 = vunpack.c.l.b16 %v727
      %v767 = vunpack.c.l.b16 %v728
      %v768 = vpack.c.b16 %v753, %v752
      %v769 = vpack.c.b16 %v755, %v754
      %v770 = vpack.c.b16 %v757, %v756
      %v771 = vpack.c.b16 %v759, %v758
      %v772 = vpack.c.b16 %v761, %v760
      %v773 = vpack.c.b16 %v763, %v762
      %v774 = vpack.c.b16 %v765, %v764
      %v775 = vpack.c.b16 %v767, %v766
      %784 = vmatprep.subr.bf16.mxu0 0
      %785 = vmatpush1.bf16.msra.mxu0 %v775
      %786 = vmatprep.subr.bf16.mxu0 0
      %787 = vmatpush1.bf16.msra.mxu0 %v774
      %788 = vmatprep.subr.bf16.mxu0 0
      %789 = vmatpush1.bf16.msra.mxu0 %v773
      %790 = vmatprep.subr.bf16.mxu0 0
      %791 = vmatpush1.bf16.msra.mxu0 %v772
      %792 = vmatprep.subr.bf16.mxu0 0
      %793 = vmatpush1.bf16.msra.mxu0 %v771
      %794 = vmatprep.subr.bf16.mxu0 0
      %795 = vmatpush1.bf16.msra.mxu0 %v770
      %796 = vmatprep.subr.bf16.mxu0 0
      %797 = vmatpush1.bf16.msra.mxu0 %v769
      %798 = vmatprep.subr.bf16.mxu0 0
      %799 = vmatpush1.bf16.msra.mxu0 %v768
      %800 = vmatprep.subr.bf16.mxu0 0
      %801 = vmatpush2.bf16.msra.mxu0 0
      %802 = vmatprep.subr.bf16.mxu0 0
      %803 = vmatpush2.bf16.msra.mxu0 0
      %804 = vmatprep.subr.bf16.mxu0 0
      %805 = vmatpush2.bf16.msra.mxu0 0
      %806 = vmatprep.subr.bf16.mxu0 0
      %807 = vmatpush2.bf16.msra.mxu0 0
      %808 = vmatprep.subr.bf16.mxu0 0
      %809 = vmatpush2.bf16.msra.mxu0 0
      %810 = vmatprep.subr.bf16.mxu0 0
      %811 = vmatpush2.bf16.msra.mxu0 0
      %812 = vmatprep.subr.bf16.mxu0 0
      %813 = vmatpush2.bf16.msra.mxu0 0
      %814 = vmatprep.subr.bf16.mxu0 0
      %815 = vmatpush2.bf16.msra.mxu0 0
      %816 = vmatprep.mubr.bf16.mxu0 0
      %817 = vmatmul.mubr.bf16.gmra.mxu0 %v705
      %v818 = vpop.f32.mrf.mxu0
      %v819 = vadd.f32 %v734, %v818
      %v820 = vpop.f32.mrf.mxu0
      %v821 = vpop.f32.mrf.mxu0
      %v822 = vadd.f32 %v734, %v821
      %v823 = vpop.f32.mrf.mxu0
      %824 = vmatprep.mubr.bf16.mxu0 0
      %825 = vmatmul.mubr.bf16.gmra.mxu0 %v706
      %v826 = vpop.f32.mrf.mxu0
      %v827 = vadd.f32 %v734, %v826
      %v828 = vpop.f32.mrf.mxu0
      %v829 = vpop.f32.mrf.mxu0
      %v830 = vadd.f32 %v734, %v829
      %v831 = vpop.f32.mrf.mxu0
      %832 = vmatprep.mubr.bf16.mxu0 0
      %833 = vmatmul.mubr.bf16.gmra.mxu0 %v707
      %v834 = vpop.f32.mrf.mxu0
      %v835 = vadd.f32 %v734, %v834
      %v836 = vpop.f32.mrf.mxu0
      %v837 = vpop.f32.mrf.mxu0
      %v838 = vadd.f32 %v734, %v837
      %v839 = vpop.f32.mrf.mxu0
      %840 = vmatprep.mubr.bf16.mxu0 0
      %841 = vmatmul.mubr.bf16.gmra.mxu0 %v708
      %v842 = vpop.f32.mrf.mxu0
      %v843 = vadd.f32 %v734, %v842
      %v844 = vpop.f32.mrf.mxu0
      %v845 = vpop.f32.mrf.mxu0
      %v846 = vadd.f32 %v734, %v845
      %v847 = vpop.f32.mrf.mxu0
      %848 = vmatprep.mubr.bf16.mxu0 0
      %849 = vmatmul.mubr.bf16.gmra.mxu0 %v709
      %v850 = vpop.f32.mrf.mxu0
      %v851 = vadd.f32 %v734, %v850
      %v852 = vpop.f32.mrf.mxu0
      %v853 = vpop.f32.mrf.mxu0
      %v854 = vadd.f32 %v734, %v853
      %v855 = vpop.f32.mrf.mxu0
      %856 = vmatprep.mubr.bf16.mxu0 0
      %857 = vmatmul.mubr.bf16.gmra.mxu0 %v710
      %v858 = vpop.f32.mrf.mxu0
      %v859 = vadd.f32 %v734, %v858
      %v860 = vpop.f32.mrf.mxu0
      %v861 = vpop.f32.mrf.mxu0
      %v862 = vadd.f32 %v734, %v861
      %v863 = vpop.f32.mrf.mxu0
      %864 = vmatprep.mubr.bf16.mxu0 0
      %865 = vmatmul.mubr.bf16.gmra.mxu0 %v711
      %v866 = vpop.f32.mrf.mxu0
      %v867 = vadd.f32 %v734, %v866
      %v868 = vpop.f32.mrf.mxu0
      %v869 = vpop.f32.mrf.mxu0
      %v870 = vadd.f32 %v734, %v869
      %v871 = vpop.f32.mrf.mxu0
      %872 = vmatprep.mubr.bf16.mxu0 0
      %873 = vmatmul.mubr.bf16.gmra.mxu0 %v712
      %v874 = vpop.f32.mrf.mxu0
      %v875 = vadd.f32 %v734, %v874
      %v876 = vpop.f32.mrf.mxu0
      %v877 = vpop.f32.mrf.mxu0
      %v878 = vadd.f32 %v734, %v877
      %v879 = vpop.f32.mrf.mxu0
      %880 = vdwg.mxu0
      %v881 = vmax.f32 %v819, 0.0
      %v882 = vmax.f32 %v822, 0.0
      %v883 = vmax.f32 %v827, 0.0
      %v884 = vmax.f32 %v830, 0.0
      %v885 = vmax.f32 %v835, 0.0
      %v886 = vmax.f32 %v838, 0.0
      %v887 = vmax.f32 %v843, 0.0
      %v888 = vmax.f32 %v846, 0.0
      %v889 = vmax.f32 %v851, 0.0
      %v890 = vmax.f32 %v854, 0.0
      %v891 = vmax.f32 %v859, 0.0
      %v892 = vmax.f32 %v862, 0.0
      %v893 = vmax.f32 %v867, 0.0
      %v894 = vmax.f32 %v870, 0.0
      %v895 = vmax.f32 %v875, 0.0
      %v896 = vmax.f32 %v878, 0.0
      %v897 = vld [vmem:[%s5] sm:$0x1]
      %v899 = vlaneseq
      %v900 = vshrl.u32 %v899, 7
      %v901 = vsub.s32 0, %v900
      %v902 = vrot.slane %v897, %v901
      %v904 = vmul.f32 %v881, %v902
      %v905 = vmul.f32 %v882, %v902
      %v906 = vmul.f32 %v883, %v902
      %v907 = vmul.f32 %v884, %v902
      %v908 = vmul.f32 %v885, %v902
      %v909 = vmul.f32 %v886, %v902
      %v910 = vmul.f32 %v887, %v902
      %v911 = vmul.f32 %v888, %v902
      %v912 = vmul.f32 %v889, %v902
      %v913 = vmul.f32 %v890, %v902
      %v914 = vmul.f32 %v891, %v902
      %v915 = vmul.f32 %v892, %v902
      %v916 = vmul.f32 %v893, %v902
      %v917 = vmul.f32 %v894, %v902
      %v918 = vmul.f32 %v895, %v902
      %v919 = vmul.f32 %v896, %v902
      %vm920 = vcmask 523264
      %v921 = vsel %vm920, %v904, 0.0
      %922 = vadd.xlane.f32.xlu0 %v921
      %v923 = vpop.xlane.xlu0 %922
      %v924 = vsel %vm920, %v905, 0.0
      %925 = vadd.xlane.f32.xlu0 %v924
      %v926 = vpop.xlane.xlu0 %925
      %v927 = vsel %vm920, %v906, 0.0
      %928 = vadd.xlane.f32.xlu0 %v927
      %v929 = vpop.xlane.xlu0 %928
      %v930 = vsel %vm920, %v907, 0.0
      %931 = vadd.xlane.f32.xlu0 %v930
      %v932 = vpop.xlane.xlu0 %931
      %v933 = vsel %vm920, %v908, 0.0
      %934 = vadd.xlane.f32.xlu0 %v933
      %v935 = vpop.xlane.xlu0 %934
      %v936 = vsel %vm920, %v909, 0.0
      %937 = vadd.xlane.f32.xlu0 %v936
      %v938 = vpop.xlane.xlu0 %937
      %v939 = vsel %vm920, %v910, 0.0
      %940 = vadd.xlane.f32.xlu0 %v939
      %v941 = vpop.xlane.xlu0 %940
      %v942 = vsel %vm920, %v911, 0.0
      %943 = vadd.xlane.f32.xlu0 %v942
      %v944 = vpop.xlane.xlu0 %943
      %v945 = vsel %vm920, %v912, 0.0
      %946 = vadd.xlane.f32.xlu0 %v945
      %v947 = vpop.xlane.xlu0 %946
      %v948 = vsel %vm920, %v913, 0.0
      %949 = vadd.xlane.f32.xlu0 %v948
      %v950 = vpop.xlane.xlu0 %949
      %v951 = vsel %vm920, %v914, 0.0
      %952 = vadd.xlane.f32.xlu0 %v951
      %v953 = vpop.xlane.xlu0 %952
      %v954 = vsel %vm920, %v915, 0.0
      %955 = vadd.xlane.f32.xlu0 %v954
      %v956 = vpop.xlane.xlu0 %955
      %v957 = vsel %vm920, %v916, 0.0
      %958 = vadd.xlane.f32.xlu0 %v957
      %v959 = vpop.xlane.xlu0 %958
      %v960 = vsel %vm920, %v917, 0.0
      %961 = vadd.xlane.f32.xlu0 %v960
      %v962 = vpop.xlane.xlu0 %961
      %v963 = vsel %vm920, %v918, 0.0
      %964 = vadd.xlane.f32.xlu0 %v963
      %v965 = vpop.xlane.xlu0 %964
      %v966 = vsel %vm920, %v919, 0.0
      %967 = vadd.xlane.f32.xlu0 %v966
      %v968 = vpop.xlane.xlu0 %967
      %v969 = vld [vmem:[%s6] sm:$0x1]
      %v971 = vlaneseq
      %v972 = vshrl.u32 %v971, 7
      %v973 = vsub.s32 0, %v972
      %v974 = vrot.slane %v969, %v973
      %v976 = vmul.f32 %v674, %v974
      %v977 = vmul.f32 %v676, %v974
      %v978 = vmul.f32 %v678, %v974
      %v979 = vmul.f32 %v680, %v974
      %v980 = vmul.f32 %v682, %v974
      %v981 = vmul.f32 %v684, %v974
      %v982 = vmul.f32 %v686, %v974
      %v983 = vmul.f32 %v688, %v974
      %v984 = vmul.f32 %v690, %v974
      %v985 = vmul.f32 %v692, %v974
      %v986 = vmul.f32 %v694, %v974
      %v987 = vmul.f32 %v696, %v974
      %v988 = vmul.f32 %v698, %v974
      %v989 = vmul.f32 %v700, %v974
      %v990 = vmul.f32 %v702, %v974
      %v991 = vmul.f32 %v704, %v974
      %vm992 = vcmask 64512
      %v993 = vsel %vm992, %v976, 0.0
      %994 = vadd.xlane.f32.xlu0 %v993
      %v995 = vpop.xlane.xlu0 %994
      %v996 = vsel %vm992, %v977, 0.0
      %997 = vadd.xlane.f32.xlu0 %v996
      %v998 = vpop.xlane.xlu0 %997
      %v999 = vsel %vm992, %v978, 0.0
      %1000 = vadd.xlane.f32.xlu0 %v999
      %v1001 = vpop.xlane.xlu0 %1000
      %v1002 = vsel %vm992, %v979, 0.0
      %1003 = vadd.xlane.f32.xlu0 %v1002
      %v1004 = vpop.xlane.xlu0 %1003
      %v1005 = vsel %vm992, %v980, 0.0
      %1006 = vadd.xlane.f32.xlu0 %v1005
      %v1007 = vpop.xlane.xlu0 %1006
      %v1008 = vsel %vm992, %v981, 0.0
      %1009 = vadd.xlane.f32.xlu0 %v1008
      %v1010 = vpop.xlane.xlu0 %1009
      %v1011 = vsel %vm992, %v982, 0.0
      %1012 = vadd.xlane.f32.xlu0 %v1011
      %v1013 = vpop.xlane.xlu0 %1012
      %v1014 = vsel %vm992, %v983, 0.0
      %1015 = vadd.xlane.f32.xlu0 %v1014
      %v1016 = vpop.xlane.xlu0 %1015
      %v1017 = vsel %vm992, %v984, 0.0
      %1018 = vadd.xlane.f32.xlu0 %v1017
      %v1019 = vpop.xlane.xlu0 %1018
      %v1020 = vsel %vm992, %v985, 0.0
      %1021 = vadd.xlane.f32.xlu0 %v1020
      %v1022 = vpop.xlane.xlu0 %1021
      %v1023 = vsel %vm992, %v986, 0.0
      %1024 = vadd.xlane.f32.xlu0 %v1023
      %v1025 = vpop.xlane.xlu0 %1024
      %v1026 = vsel %vm992, %v987, 0.0
      %1027 = vadd.xlane.f32.xlu0 %v1026
      %v1028 = vpop.xlane.xlu0 %1027
      %v1029 = vsel %vm992, %v988, 0.0
      %1030 = vadd.xlane.f32.xlu0 %v1029
      %v1031 = vpop.xlane.xlu0 %1030
      %v1032 = vsel %vm992, %v989, 0.0
      %1033 = vadd.xlane.f32.xlu0 %v1032
      %v1034 = vpop.xlane.xlu0 %1033
      %v1035 = vsel %vm992, %v990, 0.0
      %1036 = vadd.xlane.f32.xlu0 %v1035
      %v1037 = vpop.xlane.xlu0 %1036
      %v1038 = vsel %vm992, %v991, 0.0
      %1039 = vadd.xlane.f32.xlu0 %v1038
      %v1040 = vpop.xlane.xlu0 %1039
      %v1041 = vadd.f32 %v923, %v995
      %v1042 = vadd.f32 %v926, %v998
      %v1043 = vadd.f32 %v929, %v1001
      %v1044 = vadd.f32 %v932, %v1004
      %v1045 = vadd.f32 %v935, %v1007
      %v1046 = vadd.f32 %v938, %v1010
      %v1047 = vadd.f32 %v941, %v1013
      %v1048 = vadd.f32 %v944, %v1016
      %v1049 = vadd.f32 %v947, %v1019
      %v1050 = vadd.f32 %v950, %v1022
      %v1051 = vadd.f32 %v953, %v1025
      %v1052 = vadd.f32 %v956, %v1028
      %v1053 = vadd.f32 %v959, %v1031
      %v1054 = vadd.f32 %v962, %v1034
      %v1055 = vadd.f32 %v965, %v1037
      %v1056 = vadd.f32 %v968, %v1040
      %v1057 = vld [vmem:[#allocation2] sm:$0x1]
      %v1059 = vlaneseq
      %v1060 = vshrl.u32 %v1059, 7
      %v1061 = vsub.s32 0, %v1060
      %v1062 = vrot.slane %v1057, %v1061
      %v1064 = vadd.f32 %v1041, %v1062
      %v1065 = vadd.f32 %v1042, %v1062
      %v1066 = vadd.f32 %v1043, %v1062
      %v1067 = vadd.f32 %v1044, %v1062
      %v1068 = vadd.f32 %v1045, %v1062
      %v1069 = vadd.f32 %v1046, %v1062
      %v1070 = vadd.f32 %v1047, %v1062
      %v1071 = vadd.f32 %v1048, %v1062
      %v1072 = vadd.f32 %v1049, %v1062
      %v1073 = vadd.f32 %v1050, %v1062
      %v1074 = vadd.f32 %v1051, %v1062
      %v1075 = vadd.f32 %v1052, %v1062
      %v1076 = vadd.f32 %v1053, %v1062
      %v1077 = vadd.f32 %v1054, %v1062
      %v1078 = vadd.f32 %v1055, %v1062
      %v1079 = vadd.f32 %v1056, %v1062
      %v1080 = vxor.u32 %v1064, 2147483648
      %v1081 = vxor.u32 %v1065, 2147483648
      %v1082 = vxor.u32 %v1066, 2147483648
      %v1083 = vxor.u32 %v1067, 2147483648
      %v1084 = vxor.u32 %v1068, 2147483648
      %v1085 = vxor.u32 %v1069, 2147483648
      %v1086 = vxor.u32 %v1070, 2147483648
      %v1087 = vxor.u32 %v1071, 2147483648
      %v1088 = vxor.u32 %v1072, 2147483648
      %v1089 = vxor.u32 %v1073, 2147483648
      %v1090 = vxor.u32 %v1074, 2147483648
      %v1091 = vxor.u32 %v1075, 2147483648
      %v1092 = vxor.u32 %v1076, 2147483648
      %v1093 = vxor.u32 %v1077, 2147483648
      %v1094 = vxor.u32 %v1078, 2147483648
      %v1095 = vxor.u32 %v1079, 2147483648
      %v1096 = vmul.f32 %v1080, 1.442695
      %v1097 = vpow.pop %v1096
      %v1098 = vmul.f32 %v1081, 1.442695
      %v1099 = vpow.pop %v1098
      %v1100 = vmul.f32 %v1082, 1.442695
      %v1101 = vpow.pop %v1100
      %v1102 = vmul.f32 %v1083, 1.442695
      %v1103 = vpow.pop %v1102
      %v1104 = vmul.f32 %v1084, 1.442695
      %v1105 = vpow.pop %v1104
      %v1106 = vmul.f32 %v1085, 1.442695
      %v1107 = vpow.pop %v1106
      %v1108 = vmul.f32 %v1086, 1.442695
      %v1109 = vpow.pop %v1108
      %v1110 = vmul.f32 %v1087, 1.442695
      %v1111 = vpow.pop %v1110
      %v1112 = vmul.f32 %v1088, 1.442695
      %v1113 = vpow.pop %v1112
      %v1114 = vmul.f32 %v1089, 1.442695
      %v1115 = vpow.pop %v1114
      %v1116 = vmul.f32 %v1090, 1.442695
      %v1117 = vpow.pop %v1116
      %v1118 = vmul.f32 %v1091, 1.442695
      %v1119 = vpow.pop %v1118
      %v1120 = vmul.f32 %v1092, 1.442695
      %v1121 = vpow.pop %v1120
      %v1122 = vmul.f32 %v1093, 1.442695
      %v1123 = vpow.pop %v1122
      %v1124 = vmul.f32 %v1094, 1.442695
      %v1125 = vpow.pop %v1124
      %v1126 = vmul.f32 %v1095, 1.442695
      %v1127 = vpow.pop %v1126
      %v1128 = vadd.f32 %v1097, 1.0
      %v1129 = vadd.f32 %v1099, 1.0
      %v1130 = vadd.f32 %v1101, 1.0
      %v1131 = vadd.f32 %v1103, 1.0
      %v1132 = vadd.f32 %v1105, 1.0
      %v1133 = vadd.f32 %v1107, 1.0
      %v1134 = vadd.f32 %v1109, 1.0
      %v1135 = vadd.f32 %v1111, 1.0
      %v1136 = vadd.f32 %v1113, 1.0
      %v1137 = vadd.f32 %v1115, 1.0
      %v1138 = vadd.f32 %v1117, 1.0
      %v1139 = vadd.f32 %v1119, 1.0
      %v1140 = vadd.f32 %v1121, 1.0
      %v1141 = vadd.f32 %v1123, 1.0
      %v1142 = vadd.f32 %v1125, 1.0
      %v1143 = vadd.f32 %v1127, 1.0
      %v1144 = vrcp.pop %v1128
      %v1145 = vmul.f32 1.0, %v1144
      %v1146 = vrcp.pop %v1129
      %v1147 = vmul.f32 1.0, %v1146
      %v1148 = vrcp.pop %v1130
      %v1149 = vmul.f32 1.0, %v1148
      %v1150 = vrcp.pop %v1131
      %v1151 = vmul.f32 1.0, %v1150
      %v1152 = vrcp.pop %v1132
      %v1153 = vmul.f32 1.0, %v1152
      %v1154 = vrcp.pop %v1133
      %v1155 = vmul.f32 1.0, %v1154
      %v1156 = vrcp.pop %v1134
      %v1157 = vmul.f32 1.0, %v1156
      %v1158 = vrcp.pop %v1135
      %v1159 = vmul.f32 1.0, %v1158
      %v1160 = vrcp.pop %v1136
      %v1161 = vmul.f32 1.0, %v1160
      %v1162 = vrcp.pop %v1137
      %v1163 = vmul.f32 1.0, %v1162
      %v1164 = vrcp.pop %v1138
      %v1165 = vmul.f32 1.0, %v1164
      %v1166 = vrcp.pop %v1139
      %v1167 = vmul.f32 1.0, %v1166
      %v1168 = vrcp.pop %v1140
      %v1169 = vmul.f32 1.0, %v1168
      %v1170 = vrcp.pop %v1141
      %v1171 = vmul.f32 1.0, %v1170
      %v1172 = vrcp.pop %v1142
      %v1173 = vmul.f32 1.0, %v1172
      %v1174 = vrcp.pop %v1143
      %v1175 = vmul.f32 1.0, %v1174
      %vm1176 = vcmask 7168
      %1177 = vst.msk [vmem:[%s312] sm:$0xff] %vm1176, %v1145
      %1178 = vst.msk [vmem:[%s312 + $0x8] sm:$0xff] %vm1176, %v1147
      %1179 = vst.msk [vmem:[%s312 + $0x10] sm:$0xff] %vm1176, %v1149
      %1180 = vst.msk [vmem:[%s312 + $0x18] sm:$0xff] %vm1176, %v1151
      %1181 = vst.msk [vmem:[%s312 + $0x20] sm:$0xff] %vm1176, %v1153
      %1182 = vst.msk [vmem:[%s312 + $0x28] sm:$0xff] %vm1176, %v1155
      %1183 = vst.msk [vmem:[%s312 + $0x30] sm:$0xff] %vm1176, %v1157
      %1184 = vst.msk [vmem:[%s312 + $0x38] sm:$0xff] %vm1176, %v1159
      %1185 = vst.msk [vmem:[%s312 + $0x40] sm:$0xff] %vm1176, %v1161
      %1186 = vst.msk [vmem:[%s312 + $0x48] sm:$0xff] %vm1176, %v1163
      %1187 = vst.msk [vmem:[%s312 + $0x50] sm:$0xff] %vm1176, %v1165
      %1188 = vst.msk [vmem:[%s312 + $0x58] sm:$0xff] %vm1176, %v1167
      %1189 = vst.msk [vmem:[%s312 + $0x60] sm:$0xff] %vm1176, %v1169
      %1190 = vst.msk [vmem:[%s312 + $0x68] sm:$0xff] %vm1176, %v1171
      %1191 = vst.msk [vmem:[%s312 + $0x70] sm:$0xff] %vm1176, %v1173
      %1192 = vst.msk [vmem:[%s312 + $0x78] sm:$0xff] %vm1176, %v1175
      %s1193 = smul.u32 16, %s21
      %p1194 = scmp.lt.s32.totalorder %s1193, 47
      %s1195 = scalar_select %p1194, %s1193, 47
      %s1196 = smul.addr %s1195, 8
      %s1197 = scalar_lea.vmem %s8, %s1196
      // Predicated region
      $region53: #{tpu_custom_call.1} parent=51 // pred_check
        %p1198 = pneg %p212
      $region54: #{tpu_custom_call.1} parent=51 // pred_check_branch
        %1200 = sbr.rel (%p1198) target = $region56
      $region55: #{tpu_custom_call.1} parent=51 // pred_region
        %s1201 = smul.u32 16, %s21
      $region56: #{tpu_custom_call.1} parent=51 // pred_fallthru
        _
    $region52: #{tpu_custom_call.1} parent=5 // pred_fallthru
      _
    %p1202 = scmp.le.s32.totalorder 2, %s16
    // Predicated region
    $region57: #{tpu_custom_call.1} parent=5 // pred_check
      %p1203 = pneg %p1202
    $region58: #{tpu_custom_call.1} parent=5 // pred_check_branch
      %1205 = sbr.rel (%p1203) target = $region60
    $region59: #{tpu_custom_call.1} parent=5 // pred_region
      %s1206 = ssub.s32 %s16, 2
      // Predicated region
      $region61: #{tpu_custom_call.1} parent=59 // pred_check
        %p1207 = pneg %p218
      $region62: #{tpu_custom_call.1} parent=59 // pred_check_branch
        %1209 = sbr.rel (%p1207) target = $region64
      $region63: #{tpu_custom_call.1} parent=59 // pred_region
        %s1210 = smul.u32 16, %s22
        %p1211 = scmp.lt.s32.totalorder %s1210, 47
        %s1212 = scalar_select %p1211, %s1210, 47
        %s1213 = smul.addr %s1212, 8
        %s1214 = scalar_lea.vmem %s8, %s1213
      $region64: #{tpu_custom_call.1} parent=59 // pred_fallthru
        _
    $region60: #{tpu_custom_call.1} parent=5 // pred_fallthru
      _
  $region6: #{tpu_custom_call.1} parent=0 // loop_footer
    %s20 = sadd.s32 1, %s16
  $region7: #{tpu_custom_call.1} parent=0 // loop_footer_branch
    %15 = sbr.rel target = $region3
  $region8: #{tpu_custom_call.1} parent=0 // loop_exit
    _

// kernel: tpu_custom_call.1
$region0: #{tpu_custom_call.1}
  #allocation0 [shape = 'u32[]', space=smem, size = 0x4, offset = 0x4, fixed_abs, tag = 'smem constant byte address 0x4 - core index']
  #allocation1 [shape = 'u32[144,128]{1,0:T(1,128)}', space=vmem, size = 0x12000, scoped, tag = 'internal scratch']
  #allocation2 [shape = 'f32[1,1]{1,0:T(1,128)S(1)}', space=vmem, size = 0x200, scoped, tag = 'scoped memory for tpu_custom_call.1']
  %s0 = inlined_call_operand.vmem [shape: bf16[384,160], index: 0, kind: input, shape index: {}]
  %s1 = inlined_call_operand.vmem [shape: bf16[160,136], index: 1, kind: input, shape index: {}]
  %s2 = inlined_call_operand.vmem [shape: f32[1,136], index: 2, kind: input, shape index: {}]
  %s3 = inlined_call_operand.vmem [shape: bf16[128,64], index: 3, kind: input, shape index: {}]
  %s4 = inlined_call_operand.vmem [shape: f32[1,64], index: 4, kind: input, shape index: {}]
  %s5 = inlined_call_operand.vmem [shape: f32[1,64], index: 5, kind: input, shape index: {}]
  %s6 = inlined_call_operand.vmem [shape: f32[1,8], index: 6, kind: input, shape index: {}]
  %s7 = inlined_call_operand.<no memory space> [shape: f32[1,1], index: 7, kind: input, shape index: {}]
  %s8 = inlined_call_operand.vmem [shape: f32[384,1], index: 8, kind: output, shape index: {}]
  %s9 = sld [smem:[#allocation0]]
  $region65: #{tpu_custom_call.1} parent=0
    _
  %s11 = ssub.s32 1, %s9
  %s12 = scalar_select 0, %s11, %s9
  %v13 = vstv %s7
  %14 = vst [vmem:[#allocation2] sm:$0x1] %v13
  loop: start=0, step=1, limit=5
  $region2: #{tpu_custom_call.1} parent=0 // loop_pre_header
    _
  $region3: #{tpu_custom_call.1} parent=0 // loop_header
    %s16 = sphi 0, %s20
    %p17 = scmp.ge.s32.totalorder %s16, 5
    %s26 = sphi 0, %s28
    %s29 = sphi 0, %s26
    %s30 = sphi 0, %s29
    %s46 = sphi 0, %s30
    %s50 = sphi 0, %s50
    %s52 = sphi 0, %s50
    %s53 = sphi 0, %s52
    %s67 = sphi 0, %s53
    %s71 = sphi 0, %s71
    %s73 = sphi 0, %s71
    %s74 = sphi 0, %s73
    %s88 = sphi 0, %s74
    %s92 = sphi 0, %s92
    %s94 = sphi 0, %s92
    %s95 = sphi 0, %s94
    %s109 = sphi 0, %s95
    %s113 = sphi 0, %s113
    %s115 = sphi 0, %s113
    %s116 = sphi 0, %s115
    %s130 = sphi 0, %s116
    %s134 = sphi 0, %s134
    %s136 = sphi 0, %s134
    %s137 = sphi 0, %s136
    %s151 = sphi 0, %s137
    %s155 = sphi 0, %s155
    %s157 = sphi 0, %s155
    %s158 = sphi 0, %s157
    %s172 = sphi 0, %s158
    %s176 = sphi 0, %s176
    %s178 = sphi 0, %s176
    %s179 = sphi 0, %s178
    %s193 = sphi 0, %s179
    %s199 = sphi 0, %s201
    %s202 = sphi 0, %s199
    %s203 = sphi 0, %s202
    %s219 = sphi 0, %s203
  $region4: #{tpu_custom_call.1} parent=0 // loop_header_branch
    %19 = sbr.rel (%p17) target = $region8
  $region5: #{tpu_custom_call.1} parent=0 // loop_body
    %s21 = ssub.s32 %s16, 1
    %s22 = ssub.s32 %s16, 2
    %s23 = sadd.s32 %s16, 1
    %s24 = ssub.s32 %s16, %s23
    %p25 = scmp.eq.s32.totalorder %s24, 0
    %s27 = sadd.s32 %s26, 1
    %s28 = scalar_select %p25, %s26, %s27
    %p31 = pneg %p25
    %p32 = scmp.eq.s32.totalorder %s16, 2
    %p33 = por %p31, %p32
    %p34 = scmp.ne.s32.totalorder %s26, %s29
    %p35 = scmp.eq.s32.totalorder %s16, 0
    %p36 = por %p34, %p35
    %p37 = scmp.ne.s32.totalorder %s26, %s29
    %p38 = scmp.eq.s32.totalorder %s21, 2
    %p39 = por %p37, %p38
    %p40 = scmp.ne.s32.totalorder %s29, %s30
    %p41 = scmp.eq.s32.totalorder %s21, 0
    %p42 = por %p40, %p41
    %p43 = scmp.ne.s32.totalorder %s29, %s30
    %p44 = scmp.eq.s32.totalorder %s22, 2
    %p45 = por %p43, %p44
    %p47 = scmp.ne.s32.totalorder %s30, %s46
    %p48 = scmp.eq.s32.totalorder %s22, 0
    %p49 = por %p47, %p48
    %s51 = sadd.s32 %s50, 1
    %p54 = scmp.eq.s32.totalorder %s16, 2
    %p55 = scmp.ne.s32.totalorder %s50, %s52
    %p56 = scmp.eq.s32.totalorder %s16, 0
    %p57 = por %p55, %p56
    %p58 = scmp.ne.s32.totalorder %s50, %s52
    %p59 = scmp.eq.s32.totalorder %s21, 2
    %p60 = por %p58, %p59
    %p61 = scmp.ne.s32.totalorder %s52, %s53
    %p62 = scmp.eq.s32.totalorder %s21, 0
    %p63 = por %p61, %p62
    %p64 = scmp.ne.s32.totalorder %s52, %s53
    %p65 = scmp.eq.s32.totalorder %s22, 2
    %p66 = por %p64, %p65
    %p68 = scmp.ne.s32.totalorder %s53, %s67
    %p69 = scmp.eq.s32.totalorder %s22, 0
    %p70 = por %p68, %p69
    %s72 = sadd.s32 %s71, 1
    %p75 = scmp.eq.s32.totalorder %s16, 2
    %p76 = scmp.ne.s32.totalorder %s71, %s73
    %p77 = scmp.eq.s32.totalorder %s16, 0
    %p78 = por %p76, %p77
    %p79 = scmp.ne.s32.totalorder %s71, %s73
    %p80 = scmp.eq.s32.totalorder %s21, 2
    %p81 = por %p79, %p80
    %p82 = scmp.ne.s32.totalorder %s73, %s74
    %p83 = scmp.eq.s32.totalorder %s21, 0
    %p84 = por %p82, %p83
    %p85 = scmp.ne.s32.totalorder %s73, %s74
    %p86 = scmp.eq.s32.totalorder %s22, 2
    %p87 = por %p85, %p86
    %p89 = scmp.ne.s32.totalorder %s74, %s88
    %p90 = scmp.eq.s32.totalorder %s22, 0
    %p91 = por %p89, %p90
    %s93 = sadd.s32 %s92, 1
    %p96 = scmp.eq.s32.totalorder %s16, 2
    %p97 = scmp.ne.s32.totalorder %s92, %s94
    %p98 = scmp.eq.s32.totalorder %s16, 0
    %p99 = por %p97, %p98
    %p100 = scmp.ne.s32.totalorder %s92, %s94
    %p101 = scmp.eq.s32.totalorder %s21, 2
    %p102 = por %p100, %p101
    %p103 = scmp.ne.s32.totalorder %s94, %s95
    %p104 = scmp.eq.s32.totalorder %s21, 0
    %p105 = por %p103, %p104
    %p106 = scmp.ne.s32.totalorder %s94, %s95
    %p107 = scmp.eq.s32.totalorder %s22, 2
    %p108 = por %p106, %p107
    %p110 = scmp.ne.s32.totalorder %s95, %s109
    %p111 = scmp.eq.s32.totalorder %s22, 0
    %p112 = por %p110, %p111
    %s114 = sadd.s32 %s113, 1
    %p117 = scmp.eq.s32.totalorder %s16, 2
    %p118 = scmp.ne.s32.totalorder %s113, %s115
    %p119 = scmp.eq.s32.totalorder %s16, 0
    %p120 = por %p118, %p119
    %p121 = scmp.ne.s32.totalorder %s113, %s115
    %p122 = scmp.eq.s32.totalorder %s21, 2
    %p123 = por %p121, %p122
    %p124 = scmp.ne.s32.totalorder %s115, %s116
    %p125 = scmp.eq.s32.totalorder %s21, 0
    %p126 = por %p124, %p125
    %p127 = scmp.ne.s32.totalorder %s115, %s116
    %p128 = scmp.eq.s32.totalorder %s22, 2
    %p129 = por %p127, %p128
    %p131 = scmp.ne.s32.totalorder %s116, %s130
    %p132 = scmp.eq.s32.totalorder %s22, 0
    %p133 = por %p131, %p132
    %s135 = sadd.s32 %s134, 1
    %p138 = scmp.eq.s32.totalorder %s16, 2
    %p139 = scmp.ne.s32.totalorder %s134, %s136
    %p140 = scmp.eq.s32.totalorder %s16, 0
    %p141 = por %p139, %p140
    %p142 = scmp.ne.s32.totalorder %s134, %s136
    %p143 = scmp.eq.s32.totalorder %s21, 2
    %p144 = por %p142, %p143
    %p145 = scmp.ne.s32.totalorder %s136, %s137
    %p146 = scmp.eq.s32.totalorder %s21, 0
    %p147 = por %p145, %p146
    %p148 = scmp.ne.s32.totalorder %s136, %s137
    %p149 = scmp.eq.s32.totalorder %s22, 2
    %p150 = por %p148, %p149
    %p152 = scmp.ne.s32.totalorder %s137, %s151
    %p153 = scmp.eq.s32.totalorder %s22, 0
    %p154 = por %p152, %p153
    %s156 = sadd.s32 %s155, 1
    %p159 = scmp.eq.s32.totalorder %s16, 2
    %p160 = scmp.ne.s32.totalorder %s155, %s157
    %p161 = scmp.eq.s32.totalorder %s16, 0
    %p162 = por %p160, %p161
    %p163 = scmp.ne.s32.totalorder %s155, %s157
    %p164 = scmp.eq.s32.totalorder %s21, 2
    %p165 = por %p163, %p164
    %p166 = scmp.ne.s32.totalorder %s157, %s158
    %p167 = scmp.eq.s32.totalorder %s21, 0
    %p168 = por %p166, %p167
    %p169 = scmp.ne.s32.totalorder %s157, %s158
    %p170 = scmp.eq.s32.totalorder %s22, 2
    %p171 = por %p169, %p170
    %p173 = scmp.ne.s32.totalorder %s158, %s172
    %p174 = scmp.eq.s32.totalorder %s22, 0
    %p175 = por %p173, %p174
    %s177 = sadd.s32 %s176, 1
    %p180 = scmp.eq.s32.totalorder %s16, 2
    %p181 = scmp.ne.s32.totalorder %s176, %s178
    %p182 = scmp.eq.s32.totalorder %s16, 0
    %p183 = por %p181, %p182
    %p184 = scmp.ne.s32.totalorder %s176, %s178
    %p185 = scmp.eq.s32.totalorder %s21, 2
    %p186 = por %p184, %p185
    %p187 = scmp.ne.s32.totalorder %s178, %s179
    %p188 = scmp.eq.s32.totalorder %s21, 0
    %p189 = por %p187, %p188
    %p190 = scmp.ne.s32.totalorder %s178, %s179
    %p191 = scmp.eq.s32.totalorder %s22, 2
    %p192 = por %p190, %p191
    %p194 = scmp.ne.s32.totalorder %s179, %s193
    %p195 = scmp.eq.s32.totalorder %s22, 0
    %p196 = por %p194, %p195
    %s197 = ssub.s32 %s16, %s23
    %p198 = scmp.eq.s32.totalorder %s197, 0
    %s200 = sadd.s32 %s199, 1
    %s201 = scalar_select %p198, %s199, %s200
    %p204 = pneg %p198
    %p205 = scmp.eq.s32.totalorder %s16, 2
    %p206 = por %p204, %p205
    %p207 = scmp.ne.s32.totalorder %s199, %s202
    %p208 = scmp.eq.s32.totalorder %s16, 0
    %p209 = por %p207, %p208
    %p210 = scmp.ne.s32.totalorder %s199, %s202
    %p211 = scmp.eq.s32.totalorder %s21, 2
    %p212 = por %p210, %p211
    %p213 = scmp.ne.s32.totalorder %s202, %s203
    %p214 = scmp.eq.s32.totalorder %s21, 0
    %p215 = por %p213, %p214
    %p216 = scmp.ne.s32.totalorder %s202, %s203
    %p217 = scmp.eq.s32.totalorder %s22, 2
    %p218 = por %p216, %p217
    %p220 = scmp.ne.s32.totalorder %s203, %s219
    %p221 = scmp.eq.s32.totalorder %s22, 0
    %p222 = por %p220, %p221
    %p223 = scmp.le.s32.totalorder 1, %s16
    %p224 = scmp.lt.s32.totalorder %s16, 4
    %p225 = pnand %p223, %p224
    %p226 = pneg %p225
    // Predicated region
    $region9: #{tpu_custom_call.1} parent=5 // pred_check
      _
    $region10: #{tpu_custom_call.1} parent=5 // pred_check_branch
      %228 = sbr.rel (%p225) target = $region12
    $region11: #{tpu_custom_call.1} parent=5 // pred_region
      %s229 = ssub.s32 %s16, 1
      // Predicated region
      $region13: #{tpu_custom_call.1} parent=11 // pred_check
        %p230 = pneg %p63
      $region14: #{tpu_custom_call.1} parent=11 // pred_check_branch
        %232 = sbr.rel (%p230) target = $region16
      $region15: #{tpu_custom_call.1} parent=11 // pred_region
        _
      $region16: #{tpu_custom_call.1} parent=11 // pred_fallthru
        _
      // Predicated region
      $region17: #{tpu_custom_call.1} parent=11 // pred_check
        %p233 = pneg %p84
      $region18: #{tpu_custom_call.1} parent=11 // pred_check_branch
        %235 = sbr.rel (%p233) target = $region20
      $region19: #{tpu_custom_call.1} parent=11 // pred_region
        _
      $region20: #{tpu_custom_call.1} parent=11 // pred_fallthru
        _
      // Predicated region
      $region21: #{tpu_custom_call.1} parent=11 // pred_check
        %p236 = pneg %p105
      $region22: #{tpu_custom_call.1} parent=11 // pred_check_branch
        %238 = sbr.rel (%p236) target = $region24
      $region23: #{tpu_custom_call.1} parent=11 // pred_region
        _
      $region24: #{tpu_custom_call.1} parent=11 // pred_fallthru
        _
      // Predicated region
      $region25: #{tpu_custom_call.1} parent=11 // pred_check
        %p239 = pneg %p126
      $region26: #{tpu_custom_call.1} parent=11 // pred_check_branch
        %241 = sbr.rel (%p239) target = $region28
      $region27: #{tpu_custom_call.1} parent=11 // pred_region
        _
      $region28: #{tpu_custom_call.1} parent=11 // pred_fallthru
        _
      // Predicated region
      $region29: #{tpu_custom_call.1} parent=11 // pred_check
        %p242 = pneg %p147
      $region30: #{tpu_custom_call.1} parent=11 // pred_check_branch
        %244 = sbr.rel (%p242) target = $region32
      $region31: #{tpu_custom_call.1} parent=11 // pred_region
        _
      $region32: #{tpu_custom_call.1} parent=11 // pred_fallthru
        _
      // Predicated region
      $region33: #{tpu_custom_call.1} parent=11 // pred_check
        %p245 = pneg %p168
      $region34: #{tpu_custom_call.1} parent=11 // pred_check_branch
        %247 = sbr.rel (%p245) target = $region36
      $region35: #{tpu_custom_call.1} parent=11 // pred_region
        _
      $region36: #{tpu_custom_call.1} parent=11 // pred_fallthru
        _
      // Predicated region
      $region37: #{tpu_custom_call.1} parent=11 // pred_check
        %p248 = pneg %p189
      $region38: #{tpu_custom_call.1} parent=11 // pred_check_branch
        %250 = sbr.rel (%p248) target = $region40
      $region39: #{tpu_custom_call.1} parent=11 // pred_region
        _
      $region40: #{tpu_custom_call.1} parent=11 // pred_fallthru
        _
    $region12: #{tpu_custom_call.1} parent=5 // pred_fallthru
      _
    %p251 = scmp.lt.s32.totalorder %s16, 3
    // Predicated region
    $region41: #{tpu_custom_call.1} parent=5 // pred_check
      %p252 = pneg %p251
    $region42: #{tpu_custom_call.1} parent=5 // pred_check_branch
      %254 = sbr.rel (%p252) target = $region44
    $region43: #{tpu_custom_call.1} parent=5 // pred_region
      // Predicated region
      $region45: #{tpu_custom_call.1} parent=43 // pred_check
        %p255 = pneg %p36
      $region46: #{tpu_custom_call.1} parent=43 // pred_check_branch
        %257 = sbr.rel (%p255) target = $region48
      $region47: #{tpu_custom_call.1} parent=43 // pred_region
        %s258 = smul.u32 16, %s16
        %p259 = scmp.lt.s32.totalorder %s258, 47
        %s260 = scalar_select %p259, %s258, 47
        %s261 = smul.addr %s260, 2
        %s262 = smul.addr %s261, 4
        %s263 = scalar_lea.vmem %s0, %s262
        %s264 = smul.u32 16, %s16
      $region48: #{tpu_custom_call.1} parent=43 // pred_fallthru
        _
    $region44: #{tpu_custom_call.1} parent=5 // pred_fallthru
      _
    %p265 = scmp.le.s32.totalorder 1, %s16
    %p266 = scmp.lt.s32.totalorder %s16, 4
    %p267 = pnand %p265, %p266
    %p268 = pneg %p267
    // Predicated region
    $region49: #{tpu_custom_call.1} parent=5 // pred_check
      _
    $region50: #{tpu_custom_call.1} parent=5 // pred_check_branch
      %270 = sbr.rel (%p267) target = $region52
    $region51: #{tpu_custom_call.1} parent=5 // pred_region
      %s271 = ssub.s32 %s16, 1
      %s272 = smul.u32 16, %s21
      %p273 = scmp.lt.s32.totalorder %s272, 47
      %s274 = scalar_select %p273, %s272, 47
      %s275 = smul.addr %s274, 2
      %s276 = smul.addr %s275, 4
      %s277 = scalar_lea.vmem %s0, %s276
      %p278 = pneg %p42
      %p279 = pneg %p39
      %p280 = pneg %p63
      %p281 = pneg %p60
      %p282 = pneg %p84
      %p283 = pneg %p81
      %p284 = pneg %p105
      %p285 = pneg %p102
      %p286 = pneg %p126
      %p287 = pneg %p123
      %p288 = pneg %p147
      %p289 = pneg %p144
      %p290 = pneg %p168
      %p291 = pneg %p165
      %p292 = pneg %p189
      %p293 = pneg %p186
      %p294 = pneg %p215
      %p295 = pneg %p212
      %s296 = smul.u32 16, %s21
      %p297 = scmp.lt.s32.totalorder %s296, 47
      %s298 = scalar_select %p297, %s296, 47
      %s299 = smul.addr %s298, 8
      %s300 = scalar_lea.vmem %s8, %s299
      %s301 = smul.u32 16, %s21
      %p302 = scmp.lt.s32.totalorder %s301, 47
      %s303 = scalar_select %p302, %s301, 47
      %s304 = smul.addr %s303, 2
      %s305 = smul.addr %s304, 4
      %s306 = scalar_lea.vmem %s0, %s305
      %s307 = smul.u32 16, %s21
      %s308 = smul.u32 16, %s21
      %p309 = scmp.lt.s32.totalorder %s308, 47
      %s310 = scalar_select %p309, %s308, 47
      %s311 = smul.addr %s310, 8
      %s312 = scalar_lea.vmem %s8, %s311
      %s313 = smul.u32 16, %s21
      %v315 = vld [vmem:[%s306] sm:$0xff]
      %v316 = vld [vmem:[%s306 + $0x8] sm:$0xff]
      %v317 = vld [vmem:[%s306 + $0x10] sm:$0xff]
      %v318 = vld [vmem:[%s306 + $0x18] sm:$0xff]
      %v319 = vld [vmem:[%s306 + $0x20] sm:$0xff]
      %v320 = vld [vmem:[%s306 + $0x28] sm:$0xff]
      %v321 = vld [vmem:[%s306 + $0x30] sm:$0xff]
      %v322 = vld [vmem:[%s306 + $0x38] sm:$0xff]
      %v323 = vld [vmem:[%s306 + $0x40] sm:$0xff]
      %v324 = vld [vmem:[%s306 + $0x48] sm:$0xff]
      %v325 = vld [vmem:[%s306 + $0x50] sm:$0xff]
      %v326 = vld [vmem:[%s306 + $0x58] sm:$0xff]
      %v327 = vld [vmem:[%s306 + $0x60] sm:$0xff]
      %v328 = vld [vmem:[%s306 + $0x68] sm:$0xff]
      %v329 = vld [vmem:[%s306 + $0x70] sm:$0xff]
      %v330 = vld [vmem:[%s306 + $0x78] sm:$0xff]
      %v331 = vld [vmem:[%s1] sm:$0xff]
      %v332 = vld [vmem:[%s1 + $0x8] sm:$0xff]
      %v333 = vld [vmem:[%s1 + $0x10] sm:$0xff]
      %v334 = vld [vmem:[%s1 + $0x18] sm:$0xff]
      %v335 = vld [vmem:[%s1 + $0x20] sm:$0xff]
      %v336 = vld [vmem:[%s1 + $0x28] sm:$0xff]
      %v337 = vld [vmem:[%s1 + $0x30] sm:$0xff]
      %v338 = vld [vmem:[%s1 + $0x38] sm:$0xff]
      %v339 = vld [vmem:[%s1 + $0x40] sm:$0xff]
      %v340 = vld [vmem:[%s1 + $0x48] sm:$0xff]
      %v341 = vld [vmem:[%s1 + $0x50] sm:$0xff]
      %v342 = vld [vmem:[%s1 + $0x58] sm:$0xff]
      %v343 = vld [vmem:[%s1 + $0x60] sm:$0xff]
      %v344 = vld [vmem:[%s1 + $0x68] sm:$0xff]
      %v345 = vld [vmem:[%s1 + $0x70] sm:$0xff]
      %v346 = vld [vmem:[%s1 + $0x78] sm:$0xff]
      %v347 = vld [vmem:[%s1 + $0x80] sm:$0xff]
      %v348 = vld [vmem:[%s1 + $0x88] sm:$0xff]
      %v349 = vld [vmem:[%s1 + $0x90] sm:$0xff]
      %v350 = vld [vmem:[%s1 + $0x98] sm:$0xff]
      %v351 = vld [vmem:[%s2] sm:$0x3]
      %v353 = vlaneseq
      %v354 = vshrl.u32 %v353, 7
      %v355 = vsub.s32 0, %v354
      %v356 = vrot.slane %v351, %v355
      %v357 = vlaneseq
      %v358 = vshrl.u32 %v357, 7
      %v359 = vsub.s32 1, %v358
      %v360 = vrot.slane %v351, %v359
      %v379 = vunpack.c.l.b16 %v315
      %v380 = vunpack.c.h.b16 %v315
      %v381 = vunpack.c.l.b16 %v316
      %v382 = vunpack.c.h.b16 %v316
      %v383 = vunpack.c.l.b16 %v317
      %v384 = vunpack.c.h.b16 %v317
      %v385 = vunpack.c.l.b16 %v318
      %v386 = vunpack.c.h.b16 %v318
      %v387 = vunpack.c.l.b16 %v319
      %v388 = vunpack.c.h.b16 %v319
      %v389 = vunpack.c.l.b16 %v320
      %v390 = vunpack.c.h.b16 %v320
      %v391 = vunpack.c.l.b16 %v321
      %v392 = vunpack.c.h.b16 %v321
      %v393 = vunpack.c.l.b16 %v322
      %v394 = vunpack.c.h.b16 %v322
      %v395 = vunpack.c.l.b16 %v323
      %v396 = vunpack.c.h.b16 %v323
      %v397 = vunpack.c.l.b16 %v324
      %v398 = vunpack.c.h.b16 %v324
      %v399 = vunpack.c.l.b16 %v325
      %v400 = vunpack.c.h.b16 %v325
      %v401 = vunpack.c.l.b16 %v326
      %v402 = vunpack.c.h.b16 %v326
      %v403 = vunpack.c.l.b16 %v327
      %v404 = vunpack.c.h.b16 %v327
      %v405 = vunpack.c.l.b16 %v328
      %v406 = vunpack.c.h.b16 %v328
      %v407 = vunpack.c.l.b16 %v329
      %v408 = vunpack.c.h.b16 %v329
      %v409 = vunpack.c.l.b16 %v330
      %v410 = vunpack.c.h.b16 %v330
      %v411 = vpack.c.b16 %v381, %v379
      %v412 = vpack.c.b16 %v382, %v380
      %v413 = vpack.c.b16 %v385, %v383
      %v414 = vpack.c.b16 %v386, %v384
      %v415 = vpack.c.b16 %v389, %v387
      %v416 = vpack.c.b16 %v390, %v388
      %v417 = vpack.c.b16 %v393, %v391
      %v418 = vpack.c.b16 %v394, %v392
      %v419 = vpack.c.b16 %v397, %v395
      %v420 = vpack.c.b16 %v398, %v396
      %v421 = vpack.c.b16 %v401, %v399
      %v422 = vpack.c.b16 %v402, %v400
      %v423 = vpack.c.b16 %v405, %v403
      %v424 = vpack.c.b16 %v406, %v404
      %v425 = vpack.c.b16 %v409, %v407
      %v426 = vpack.c.b16 %v410, %v408
      %v455 = vunpack.c.l.b16 %v331
      %v456 = vunpack.c.h.b16 %v331
      %v457 = vunpack.c.l.b16 %v332
      %v458 = vunpack.c.h.b16 %v332
      %v459 = vunpack.c.l.b16 %v333
      %v460 = vunpack.c.h.b16 %v333
      %v461 = vunpack.c.l.b16 %v334
      %v462 = vunpack.c.h.b16 %v334
      %v463 = vunpack.c.l.b16 %v335
      %v464 = vunpack.c.h.b16 %v335
      %v465 = vunpack.c.l.b16 %v336
      %v466 = vunpack.c.h.b16 %v336
      %v467 = vunpack.c.l.b16 %v337
      %v468 = vunpack.c.h.b16 %v337
      %v469 = vunpack.c.l.b16 %v338
      %v470 = vunpack.c.h.b16 %v338
      %v471 = vunpack.c.l.b16 %v339
      %v472 = vunpack.c.h.b16 %v339
      %v473 = vunpack.c.l.b16 %v340
      %v474 = vunpack.c.h.b16 %v340
      %v475 = vunpack.c.l.b16 %v341
      %v476 = vunpack.c.h.b16 %v341
      %v477 = vunpack.c.l.b16 %v342
      %v478 = vunpack.c.h.b16 %v342
      %v479 = vunpack.c.l.b16 %v343
      %v480 = vunpack.c.h.b16 %v343
      %v481 = vunpack.c.l.b16 %v344
      %v482 = vunpack.c.h.b16 %v344
      %v483 = vunpack.c.l.b16 %v345
      %v484 = vunpack.c.h.b16 %v345
      %v485 = vunpack.c.l.b16 %v346
      %v486 = vunpack.c.h.b16 %v346
      %v487 = vunpack.c.l.b16 %v347
      %v488 = vunpack.c.h.b16 %v347
      %v489 = vunpack.c.l.b16 %v348
      %v490 = vunpack.c.h.b16 %v348
      %v491 = vunpack.c.l.b16 %v349
      %v492 = vunpack.c.h.b16 %v349
      %v493 = vunpack.c.l.b16 %v350
      %v494 = vunpack.c.h.b16 %v350
      %v495 = vpack.c.b16 %v457, %v455
      %v496 = vpack.c.b16 %v458, %v456
      %v497 = vpack.c.b16 %v461, %v459
      %v498 = vpack.c.b16 %v462, %v460
      %v499 = vpack.c.b16 %v465, %v463
      %v500 = vpack.c.b16 %v466, %v464
      %v501 = vpack.c.b16 %v469, %v467
      %v502 = vpack.c.b16 %v470, %v468
      %v503 = vpack.c.b16 %v473, %v471
      %v504 = vpack.c.b16 %v474, %v472
      %v505 = vpack.c.b16 %v477, %v475
      %v506 = vpack.c.b16 %v478, %v476
      %v507 = vpack.c.b16 %v481, %v479
      %v508 = vpack.c.b16 %v482, %v480
      %v509 = vpack.c.b16 %v485, %v483
      %v510 = vpack.c.b16 %v486, %v484
      %v511 = vpack.c.b16 %v489, %v487
      %v512 = vpack.c.b16 %v490, %v488
      %v513 = vpack.c.b16 %v493, %v491
      %v514 = vpack.c.b16 %v494, %v492
      %vm535 = vcmask 261120
      %v537 = vsel %vm535, %v412, 0
      %v540 = vsel %vm535, %v414, 0
      %v543 = vsel %vm535, %v416, 0
      %v546 = vsel %vm535, %v418, 0
      %v549 = vsel %vm535, %v420, 0
      %v552 = vsel %vm535, %v422, 0
      %v555 = vsel %vm535, %v424, 0
      %v558 = vsel %vm535, %v426, 0
      %560 = vmatprep.subr.bf16.mxu0 %v510
      %561 = vmatpush1.bf16.msra.mxu0 %v509
      %562 = vmatprep.subr.bf16.mxu0 %v508
      %563 = vmatpush1.bf16.msra.mxu0 %v507
      %564 = vmatprep.subr.bf16.mxu0 %v506
      %565 = vmatpush1.bf16.msra.mxu0 %v505
      %566 = vmatprep.subr.bf16.mxu0 %v504
      %567 = vmatpush1.bf16.msra.mxu0 %v503
      %568 = vmatprep.subr.bf16.mxu0 %v502
      %569 = vmatpush1.bf16.msra.mxu0 %v501
      %570 = vmatprep.subr.bf16.mxu0 %v500
      %571 = vmatpush1.bf16.msra.mxu0 %v499
      %572 = vmatprep.subr.bf16.mxu0 %v498
      %573 = vmatpush1.bf16.msra.mxu0 %v497
      %574 = vmatprep.subr.bf16.mxu0 %v496
      %575 = vmatpush1.bf16.msra.mxu0 %v495
      %576 = vmatprep.subr.bf16.mxu0 0
      %577 = vmatpush2.bf16.msra.mxu0 0
      %578 = vmatprep.subr.bf16.mxu0 0
      %579 = vmatpush2.bf16.msra.mxu0 0
      %580 = vmatprep.subr.bf16.mxu0 0
      %581 = vmatpush2.bf16.msra.mxu0 0
      %582 = vmatprep.subr.bf16.mxu0 0
      %583 = vmatpush2.bf16.msra.mxu0 0
      %584 = vmatprep.subr.bf16.mxu0 0
      %585 = vmatpush2.bf16.msra.mxu0 0
      %586 = vmatprep.subr.bf16.mxu0 0
      %587 = vmatpush2.bf16.msra.mxu0 0
      %588 = vmatprep.subr.bf16.mxu0 %v514
      %589 = vmatpush2.bf16.msra.mxu0 %v513
      %590 = vmatprep.subr.bf16.mxu0 %v512
      %591 = vmatpush2.bf16.msra.mxu0 %v511
      %592 = vmatprep.mubr.bf16.mxu0 %v537
      %593 = vmatmul.mubr.bf16.gmra.mxu0 %v411
      %v594 = vpop.f32.mrf.mxu0
      %v595 = vadd.f32 %v356, %v594
      %v596 = vpop.f32.mrf.mxu0
      %v597 = vadd.f32 %v360, %v596
      %v598 = vpop.f32.mrf.mxu0
      %v599 = vadd.f32 %v356, %v598
      %v600 = vpop.f32.mrf.mxu0
      %v601 = vadd.f32 %v360, %v600
      %602 = vmatprep.mubr.bf16.mxu0 %v540
      %603 = vmatmul.mubr.bf16.gmra.mxu0 %v413
      %v604 = vpop.f32.mrf.mxu0
      %v605 = vadd.f32 %v356, %v604
      %v606 = vpop.f32.mrf.mxu0
      %v607 = vadd.f32 %v360, %v606
      %v608 = vpop.f32.mrf.mxu0
      %v609 = vadd.f32 %v356, %v608
      %v610 = vpop.f32.mrf.mxu0
      %v611 = vadd.f32 %v360, %v610
      %612 = vmatprep.mubr.bf16.mxu0 %v543
      %613 = vmatmul.mubr.bf16.gmra.mxu0 %v415
      %v614 = vpop.f32.mrf.mxu0
      %v615 = vadd.f32 %v356, %v614
      %v616 = vpop.f32.mrf.mxu0
      %v617 = vadd.f32 %v360, %v616
      %v618 = vpop.f32.mrf.mxu0
      %v619 = vadd.f32 %v356, %v618
      %v620 = vpop.f32.mrf.mxu0
      %v621 = vadd.f32 %v360, %v620
      %622 = vmatprep.mubr.bf16.mxu0 %v546
      %623 = vmatmul.mubr.bf16.gmra.mxu0 %v417
      %v624 = vpop.f32.mrf.mxu0
      %v625 = vadd.f32 %v356, %v624
      %v626 = vpop.f32.mrf.mxu0
      %v627 = vadd.f32 %v360, %v626
      %v628 = vpop.f32.mrf.mxu0
      %v629 = vadd.f32 %v356, %v628
      %v630 = vpop.f32.mrf.mxu0
      %v631 = vadd.f32 %v360, %v630
      %632 = vmatprep.mubr.bf16.mxu0 %v549
      %633 = vmatmul.mubr.bf16.gmra.mxu0 %v419
      %v634 = vpop.f32.mrf.mxu0
      %v635 = vadd.f32 %v356, %v634
      %v636 = vpop.f32.mrf.mxu0
      %v637 = vadd.f32 %v360, %v636
      %v638 = vpop.f32.mrf.mxu0
      %v639 = vadd.f32 %v356, %v638
      %v640 = vpop.f32.mrf.mxu0
      %v641 = vadd.f32 %v360, %v640
      %642 = vmatprep.mubr.bf16.mxu0 %v552
      %643 = vmatmul.mubr.bf16.gmra.mxu0 %v421
      %v644 = vpop.f32.mrf.mxu0
      %v645 = vadd.f32 %v356, %v644
      %v646 = vpop.f32.mrf.mxu0
      %v647 = vadd.f32 %v360, %v646
      %v648 = vpop.f32.mrf.mxu0
      %v649 = vadd.f32 %v356, %v648
      %v650 = vpop.f32.mrf.mxu0
      %v651 = vadd.f32 %v360, %v650
      %652 = vmatprep.mubr.bf16.mxu0 %v555
      %653 = vmatmul.mubr.bf16.gmra.mxu0 %v423
      %v654 = vpop.f32.mrf.mxu0
      %v655 = vadd.f32 %v356, %v654
      %v656 = vpop.f32.mrf.mxu0
      %v657 = vadd.f32 %v360, %v656
      %v658 = vpop.f32.mrf.mxu0
      %v659 = vadd.f32 %v356, %v658
      %v660 = vpop.f32.mrf.mxu0
      %v661 = vadd.f32 %v360, %v660
      %662 = vmatprep.mubr.bf16.mxu0 %v558
      %663 = vmatmul.mubr.bf16.gmra.mxu0 %v425
      %v664 = vpop.f32.mrf.mxu0
      %v665 = vadd.f32 %v356, %v664
      %v666 = vpop.f32.mrf.mxu0
      %v667 = vadd.f32 %v360, %v666
      %v668 = vpop.f32.mrf.mxu0
      %v669 = vadd.f32 %v356, %v668
      %v670 = vpop.f32.mrf.mxu0
      %v671 = vadd.f32 %v360, %v670
      %672 = vdwg.mxu0
      %v673 = vmax.f32 %v595, 0.0
      %v674 = vmax.f32 %v597, 0.0
      %v675 = vmax.f32 %v599, 0.0
      %v676 = vmax.f32 %v601, 0.0
      %v677 = vmax.f32 %v605, 0.0
      %v678 = vmax.f32 %v607, 0.0
      %v679 = vmax.f32 %v609, 0.0
      %v680 = vmax.f32 %v611, 0.0
      %v681 = vmax.f32 %v615, 0.0
      %v682 = vmax.f32 %v617, 0.0
      %v683 = vmax.f32 %v619, 0.0
      %v684 = vmax.f32 %v621, 0.0
      %v685 = vmax.f32 %v625, 0.0
      %v686 = vmax.f32 %v627, 0.0
      %v687 = vmax.f32 %v629, 0.0
      %v688 = vmax.f32 %v631, 0.0
      %v689 = vmax.f32 %v635, 0.0
      %v690 = vmax.f32 %v637, 0.0
      %v691 = vmax.f32 %v639, 0.0
      %v692 = vmax.f32 %v641, 0.0
      %v693 = vmax.f32 %v645, 0.0
      %v694 = vmax.f32 %v647, 0.0
      %v695 = vmax.f32 %v649, 0.0
      %v696 = vmax.f32 %v651, 0.0
      %v697 = vmax.f32 %v655, 0.0
      %v698 = vmax.f32 %v657, 0.0
      %v699 = vmax.f32 %v659, 0.0
      %v700 = vmax.f32 %v661, 0.0
      %v701 = vmax.f32 %v665, 0.0
      %v702 = vmax.f32 %v667, 0.0
      %v703 = vmax.f32 %v669, 0.0
      %v704 = vmax.f32 %v671, 0.0
      %v705 = vpack.c.bf16 %v675, %v673
      %v706 = vpack.c.bf16 %v679, %v677
      %v707 = vpack.c.bf16 %v683, %v681
      %v708 = vpack.c.bf16 %v687, %v685
      %v709 = vpack.c.bf16 %v691, %v689
      %v710 = vpack.c.bf16 %v695, %v693
      %v711 = vpack.c.bf16 %v699, %v697
      %v712 = vpack.c.bf16 %v703, %v701
      %v713 = vld [vmem:[%s3] sm:$0xf]
      %v714 = vld [vmem:[%s3 + $0x4] sm:$0xf]
      %v715 = vld [vmem:[%s3 + $0x8] sm:$0xf]
      %v716 = vld [vmem:[%s3 + $0xc] sm:$0xf]
      %v717 = vld [vmem:[%s3 + $0x10] sm:$0xf]
      %v718 = vld [vmem:[%s3 + $0x14] sm:$0xf]
      %v719 = vld [vmem:[%s3 + $0x18] sm:$0xf]
      %v720 = vld [vmem:[%s3 + $0x1c] sm:$0xf]
      %v721 = vld [vmem:[%s3 + $0x20] sm:$0xf]
      %v722 = vld [vmem:[%s3 + $0x24] sm:$0xf]
      %v723 = vld [vmem:[%s3 + $0x28] sm:$0xf]
      %v724 = vld [vmem:[%s3 + $0x2c] sm:$0xf]
      %v725 = vld [vmem:[%s3 + $0x30] sm:$0xf]
      %v726 = vld [vmem:[%s3 + $0x34] sm:$0xf]
      %v727 = vld [vmem:[%s3 + $0x38] sm:$0xf]
      %v728 = vld [vmem:[%s3 + $0x3c] sm:$0xf]
      %v729 = vld [vmem:[%s4] sm:$0x1]
      %v731 = vlaneseq
      %v732 = vshrl.u32 %v731, 7
      %v733 = vsub.s32 0, %v732
      %v734 = vrot.slane %v729, %v733
      %v752 = vunpack.c.l.b16 %v713
      %v753 = vunpack.c.l.b16 %v714
      %v754 = vunpack.c.l.b16 %v715
      %v755 = vunpack.c.l.b16 %v716
      %v756 = vunpack.c.l.b16 %v717
      %v757 = vunpack.c.l.b16 %v718
      %v758 = vunpack.c.l.b16 %v719
      %v759 = vunpack.c.l.b16 %v720
      %v760 = vunpack.c.l.b16 %v721
      %v761 = vunpack.c.l.b16 %v722
      %v762 = vunpack.c.l.b16 %v723
      %v763 = vunpack.c.l.b16 %v724
      %v764 = vunpack.c.l.b16 %v725
      %v765 = vunpack.c.l.b16 %v726
      %v766 = vunpack.c.l.b16 %v727
      %v767 = vunpack.c.l.b16 %v728
      %v768 = vpack.c.b16 %v753, %v752
      %v769 = vpack.c.b16 %v755, %v754
      %v770 = vpack.c.b16 %v757, %v756
      %v771 = vpack.c.b16 %v759, %v758
      %v772 = vpack.c.b16 %v761, %v760
      %v773 = vpack.c.b16 %v763, %v762
      %v774 = vpack.c.b16 %v765, %v764
      %v775 = vpack.c.b16 %v767, %v766
      %784 = vmatprep.subr.bf16.mxu0 0
      %785 = vmatpush1.bf16.msra.mxu0 %v775
      %786 = vmatprep.subr.bf16.mxu0 0
      %787 = vmatpush1.bf16.msra.mxu0 %v774
      %788 = vmatprep.subr.bf16.mxu0 0
      %789 = vmatpush1.bf16.msra.mxu0 %v773
      %790 = vmatprep.subr.bf16.mxu0 0
      %791 = vmatpush1.bf16.msra.mxu0 %v772
      %792 = vmatprep.subr.bf16.mxu0 0
      %793 = vmatpush1.bf16.msra.mxu0 %v771
      %794 = vmatprep.subr.bf16.mxu0 0
      %795 = vmatpush1.bf16.msra.mxu0 %v770
      %796 = vmatprep.subr.bf16.mxu0 0
      %797 = vmatpush1.bf16.msra.mxu0 %v769
      %798 = vmatprep.subr.bf16.mxu0 0
      %799 = vmatpush1.bf16.msra.mxu0 %v768
      %800 = vmatprep.subr.bf16.mxu0 0
      %801 = vmatpush2.bf16.msra.mxu0 0
      %802 = vmatprep.subr.bf16.mxu0 0
      %803 = vmatpush2.bf16.msra.mxu0 0
      %804 = vmatprep.subr.bf16.mxu0 0
      %805 = vmatpush2.bf16.msra.mxu0 0
      %806 = vmatprep.subr.bf16.mxu0 0
      %807 = vmatpush2.bf16.msra.mxu0 0
      %808 = vmatprep.subr.bf16.mxu0 0
      %809 = vmatpush2.bf16.msra.mxu0 0
      %810 = vmatprep.subr.bf16.mxu0 0
      %811 = vmatpush2.bf16.msra.mxu0 0
      %812 = vmatprep.subr.bf16.mxu0 0
      %813 = vmatpush2.bf16.msra.mxu0 0
      %814 = vmatprep.subr.bf16.mxu0 0
      %815 = vmatpush2.bf16.msra.mxu0 0
      %816 = vmatprep.mubr.bf16.mxu0 0
      %817 = vmatmul.mubr.bf16.gmra.mxu0 %v705
      %v818 = vpop.f32.mrf.mxu0
      %v819 = vadd.f32 %v734, %v818
      %v820 = vpop.f32.mrf.mxu0
      %v821 = vpop.f32.mrf.mxu0
      %v822 = vadd.f32 %v734, %v821
      %v823 = vpop.f32.mrf.mxu0
      %824 = vmatprep.mubr.bf16.mxu0 0
      %825 = vmatmul.mubr.bf16.gmra.mxu0 %v706
      %v826 = vpop.f32.mrf.mxu0
      %v827 = vadd.f32 %v734, %v826
      %v828 = vpop.f32.mrf.mxu0
      %v829 = vpop.f32.mrf.mxu0
      %v830 = vadd.f32 %v734, %v829
      %v831 = vpop.f32.mrf.mxu0
      %832 = vmatprep.mubr.bf16.mxu0 0
      %833 = vmatmul.mubr.bf16.gmra.mxu0 %v707
      %v834 = vpop.f32.mrf.mxu0
      %v835 = vadd.f32 %v734, %v834
      %v836 = vpop.f32.mrf.mxu0
      %v837 = vpop.f32.mrf.mxu0
      %v838 = vadd.f32 %v734, %v837
      %v839 = vpop.f32.mrf.mxu0
      %840 = vmatprep.mubr.bf16.mxu0 0
      %841 = vmatmul.mubr.bf16.gmra.mxu0 %v708
      %v842 = vpop.f32.mrf.mxu0
      %v843 = vadd.f32 %v734, %v842
      %v844 = vpop.f32.mrf.mxu0
      %v845 = vpop.f32.mrf.mxu0
      %v846 = vadd.f32 %v734, %v845
      %v847 = vpop.f32.mrf.mxu0
      %848 = vmatprep.mubr.bf16.mxu0 0
      %849 = vmatmul.mubr.bf16.gmra.mxu0 %v709
      %v850 = vpop.f32.mrf.mxu0
      %v851 = vadd.f32 %v734, %v850
      %v852 = vpop.f32.mrf.mxu0
      %v853 = vpop.f32.mrf.mxu0
      %v854 = vadd.f32 %v734, %v853
      %v855 = vpop.f32.mrf.mxu0
      %856 = vmatprep.mubr.bf16.mxu0 0
      %857 = vmatmul.mubr.bf16.gmra.mxu0 %v710
      %v858 = vpop.f32.mrf.mxu0
      %v859 = vadd.f32 %v734, %v858
      %v860 = vpop.f32.mrf.mxu0
      %v861 = vpop.f32.mrf.mxu0
      %v862 = vadd.f32 %v734, %v861
      %v863 = vpop.f32.mrf.mxu0
      %864 = vmatprep.mubr.bf16.mxu0 0
      %865 = vmatmul.mubr.bf16.gmra.mxu0 %v711
      %v866 = vpop.f32.mrf.mxu0
      %v867 = vadd.f32 %v734, %v866
      %v868 = vpop.f32.mrf.mxu0
      %v869 = vpop.f32.mrf.mxu0
      %v870 = vadd.f32 %v734, %v869
      %v871 = vpop.f32.mrf.mxu0
      %872 = vmatprep.mubr.bf16.mxu0 0
      %873 = vmatmul.mubr.bf16.gmra.mxu0 %v712
      %v874 = vpop.f32.mrf.mxu0
      %v875 = vadd.f32 %v734, %v874
      %v876 = vpop.f32.mrf.mxu0
      %v877 = vpop.f32.mrf.mxu0
      %v878 = vadd.f32 %v734, %v877
      %v879 = vpop.f32.mrf.mxu0
      %880 = vdwg.mxu0
      %v881 = vmax.f32 %v819, 0.0
      %v882 = vmax.f32 %v822, 0.0
      %v883 = vmax.f32 %v827, 0.0
      %v884 = vmax.f32 %v830, 0.0
      %v885 = vmax.f32 %v835, 0.0
      %v886 = vmax.f32 %v838, 0.0
      %v887 = vmax.f32 %v843, 0.0
      %v888 = vmax.f32 %v846, 0.0
      %v889 = vmax.f32 %v851, 0.0
      %v890 = vmax.f32 %v854, 0.0
      %v891 = vmax.f32 %v859, 0.0
      %v892 = vmax.f32 %v862, 0.0
      %v893 = vmax.f32 %v867, 0.0
      %v894 = vmax.f32 %v870, 0.0
      %v895 = vmax.f32 %v875, 0.0
      %v896 = vmax.f32 %v878, 0.0
      %v897 = vld [vmem:[%s5] sm:$0x1]
      %v899 = vlaneseq
      %v900 = vshrl.u32 %v899, 7
      %v901 = vsub.s32 0, %v900
      %v902 = vrot.slane %v897, %v901
      %v904 = vmul.f32 %v881, %v902
      %v905 = vmul.f32 %v882, %v902
      %v906 = vmul.f32 %v883, %v902
      %v907 = vmul.f32 %v884, %v902
      %v908 = vmul.f32 %v885, %v902
      %v909 = vmul.f32 %v886, %v902
      %v910 = vmul.f32 %v887, %v902
      %v911 = vmul.f32 %v888, %v902
      %v912 = vmul.f32 %v889, %v902
      %v913 = vmul.f32 %v890, %v902
      %v914 = vmul.f32 %v891, %v902
      %v915 = vmul.f32 %v892, %v902
      %v916 = vmul.f32 %v893, %v902
      %v917 = vmul.f32 %v894, %v902
      %v918 = vmul.f32 %v895, %v902
      %v919 = vmul.f32 %v896, %v902
      %vm920 = vcmask 523264
      %v921 = vsel %vm920, %v904, 0.0
      %922 = vadd.xlane.f32.xlu0 %v921
      %v923 = vpop.xlane.xlu0 %922
      %v924 = vsel %vm920, %v905, 0.0
      %925 = vadd.xlane.f32.xlu0 %v924
      %v926 = vpop.xlane.xlu0 %925
      %v927 = vsel %vm920, %v906, 0.0
      %928 = vadd.xlane.f32.xlu0 %v927
      %v929 = vpop.xlane.xlu0 %928
      %v930 = vsel %vm920, %v907, 0.0
      %931 = vadd.xlane.f32.xlu0 %v930
      %v932 = vpop.xlane.xlu0 %931
      %v933 = vsel %vm920, %v908, 0.0
      %934 = vadd.xlane.f32.xlu0 %v933
      %v935 = vpop.xlane.xlu0 %934
      %v936 = vsel %vm920, %v909, 0.0
      %937 = vadd.xlane.f32.xlu0 %v936
      %v938 = vpop.xlane.xlu0 %937
      %v939 = vsel %vm920, %v910, 0.0
      %940 = vadd.xlane.f32.xlu0 %v939
      %v941 = vpop.xlane.xlu0 %940
      %v942 = vsel %vm920, %v911, 0.0
      %943 = vadd.xlane.f32.xlu0 %v942
      %v944 = vpop.xlane.xlu0 %943
      %v945 = vsel %vm920, %v912, 0.0
      %946 = vadd.xlane.f32.xlu0 %v945
      %v947 = vpop.xlane.xlu0 %946
      %v948 = vsel %vm920, %v913, 0.0
      %949 = vadd.xlane.f32.xlu0 %v948
      %v950 = vpop.xlane.xlu0 %949
      %v951 = vsel %vm920, %v914, 0.0
      %952 = vadd.xlane.f32.xlu0 %v951
      %v953 = vpop.xlane.xlu0 %952
      %v954 = vsel %vm920, %v915, 0.0
      %955 = vadd.xlane.f32.xlu0 %v954
      %v956 = vpop.xlane.xlu0 %955
      %v957 = vsel %vm920, %v916, 0.0
      %958 = vadd.xlane.f32.xlu0 %v957
      %v959 = vpop.xlane.xlu0 %958
      %v960 = vsel %vm920, %v917, 0.0
      %961 = vadd.xlane.f32.xlu0 %v960
      %v962 = vpop.xlane.xlu0 %961
      %v963 = vsel %vm920, %v918, 0.0
      %964 = vadd.xlane.f32.xlu0 %v963
      %v965 = vpop.xlane.xlu0 %964
      %v966 = vsel %vm920, %v919, 0.0
      %967 = vadd.xlane.f32.xlu0 %v966
      %v968 = vpop.xlane.xlu0 %967
      %v969 = vld [vmem:[%s6] sm:$0x1]
      %v971 = vlaneseq
      %v972 = vshrl.u32 %v971, 7
      %v973 = vsub.s32 0, %v972
      %v974 = vrot.slane %v969, %v973
      %v976 = vmul.f32 %v674, %v974
      %v977 = vmul.f32 %v676, %v974
      %v978 = vmul.f32 %v678, %v974
      %v979 = vmul.f32 %v680, %v974
      %v980 = vmul.f32 %v682, %v974
      %v981 = vmul.f32 %v684, %v974
      %v982 = vmul.f32 %v686, %v974
      %v983 = vmul.f32 %v688, %v974
      %v984 = vmul.f32 %v690, %v974
      %v985 = vmul.f32 %v692, %v974
      %v986 = vmul.f32 %v694, %v974
      %v987 = vmul.f32 %v696, %v974
      %v988 = vmul.f32 %v698, %v974
      %v989 = vmul.f32 %v700, %v974
      %v990 = vmul.f32 %v702, %v974
      %v991 = vmul.f32 %v704, %v974
      %vm992 = vcmask 64512
      %v993 = vsel %vm992, %v976, 0.0
      %994 = vadd.xlane.f32.xlu0 %v993
      %v995 = vpop.xlane.xlu0 %994
      %v996 = vsel %vm992, %v977, 0.0
      %997 = vadd.xlane.f32.xlu0 %v996
      %v998 = vpop.xlane.xlu0 %997
      %v999 = vsel %vm992, %v978, 0.0
      %1000 = vadd.xlane.f32.xlu0 %v999
      %v1001 = vpop.xlane.xlu0 %1000
      %v1002 = vsel %vm992, %v979, 0.0
      %1003 = vadd.xlane.f32.xlu0 %v1002
      %v1004 = vpop.xlane.xlu0 %1003
      %v1005 = vsel %vm992, %v980, 0.0
      %1006 = vadd.xlane.f32.xlu0 %v1005
      %v1007 = vpop.xlane.xlu0 %1006
      %v1008 = vsel %vm992, %v981, 0.0
      %1009 = vadd.xlane.f32.xlu0 %v1008
      %v1010 = vpop.xlane.xlu0 %1009
      %v1011 = vsel %vm992, %v982, 0.0
      %1012 = vadd.xlane.f32.xlu0 %v1011
      %v1013 = vpop.xlane.xlu0 %1012
      %v1014 = vsel %vm992, %v983, 0.0
      %1015 = vadd.xlane.f32.xlu0 %v1014
      %v1016 = vpop.xlane.xlu0 %1015
      %v1017 = vsel %vm992, %v984, 0.0
      %1018 = vadd.xlane.f32.xlu0 %v1017
      %v1019 = vpop.xlane.xlu0 %1018
      %v1020 = vsel %vm992, %v985, 0.0
      %1021 = vadd.xlane.f32.xlu0 %v1020
      %v1022 = vpop.xlane.xlu0 %1021
      %v1023 = vsel %vm992, %v986, 0.0
      %1024 = vadd.xlane.f32.xlu0 %v1023
      %v1025 = vpop.xlane.xlu0 %1024
      %v1026 = vsel %vm992, %v987, 0.0
      %1027 = vadd.xlane.f32.xlu0 %v1026
      %v1028 = vpop.xlane.xlu0 %1027
      %v1029 = vsel %vm992, %v988, 0.0
      %1030 = vadd.xlane.f32.xlu0 %v1029
      %v1031 = vpop.xlane.xlu0 %1030
      %v1032 = vsel %vm992, %v989, 0.0
      %1033 = vadd.xlane.f32.xlu0 %v1032
      %v1034 = vpop.xlane.xlu0 %1033
      %v1035 = vsel %vm992, %v990, 0.0
      %1036 = vadd.xlane.f32.xlu0 %v1035
      %v1037 = vpop.xlane.xlu0 %1036
      %v1038 = vsel %vm992, %v991, 0.0
      %1039 = vadd.xlane.f32.xlu0 %v1038
      %v1040 = vpop.xlane.xlu0 %1039
      %v1041 = vadd.f32 %v923, %v995
      %v1042 = vadd.f32 %v926, %v998
      %v1043 = vadd.f32 %v929, %v1001
      %v1044 = vadd.f32 %v932, %v1004
      %v1045 = vadd.f32 %v935, %v1007
      %v1046 = vadd.f32 %v938, %v1010
      %v1047 = vadd.f32 %v941, %v1013
      %v1048 = vadd.f32 %v944, %v1016
      %v1049 = vadd.f32 %v947, %v1019
      %v1050 = vadd.f32 %v950, %v1022
      %v1051 = vadd.f32 %v953, %v1025
      %v1052 = vadd.f32 %v956, %v1028
      %v1053 = vadd.f32 %v959, %v1031
      %v1054 = vadd.f32 %v962, %v1034
      %v1055 = vadd.f32 %v965, %v1037
      %v1056 = vadd.f32 %v968, %v1040
      %v1057 = vld [vmem:[#allocation2] sm:$0x1]
      %v1059 = vlaneseq
      %v1060 = vshrl.u32 %v1059, 7
      %v1061 = vsub.s32 0, %v1060
      %v1062 = vrot.slane %v1057, %v1061
      %v1064 = vadd.f32 %v1041, %v1062
      %v1065 = vadd.f32 %v1042, %v1062
      %v1066 = vadd.f32 %v1043, %v1062
      %v1067 = vadd.f32 %v1044, %v1062
      %v1068 = vadd.f32 %v1045, %v1062
      %v1069 = vadd.f32 %v1046, %v1062
      %v1070 = vadd.f32 %v1047, %v1062
      %v1071 = vadd.f32 %v1048, %v1062
      %v1072 = vadd.f32 %v1049, %v1062
      %v1073 = vadd.f32 %v1050, %v1062
      %v1074 = vadd.f32 %v1051, %v1062
      %v1075 = vadd.f32 %v1052, %v1062
      %v1076 = vadd.f32 %v1053, %v1062
      %v1077 = vadd.f32 %v1054, %v1062
      %v1078 = vadd.f32 %v1055, %v1062
      %v1079 = vadd.f32 %v1056, %v1062
      %v1080 = vxor.u32 %v1064, 2147483648
      %v1081 = vxor.u32 %v1065, 2147483648
      %v1082 = vxor.u32 %v1066, 2147483648
      %v1083 = vxor.u32 %v1067, 2147483648
      %v1084 = vxor.u32 %v1068, 2147483648
      %v1085 = vxor.u32 %v1069, 2147483648
      %v1086 = vxor.u32 %v1070, 2147483648
      %v1087 = vxor.u32 %v1071, 2147483648
      %v1088 = vxor.u32 %v1072, 2147483648
      %v1089 = vxor.u32 %v1073, 2147483648
      %v1090 = vxor.u32 %v1074, 2147483648
      %v1091 = vxor.u32 %v1075, 2147483648
      %v1092 = vxor.u32 %v1076, 2147483648
      %v1093 = vxor.u32 %v1077, 2147483648
      %v1094 = vxor.u32 %v1078, 2147483648
      %v1095 = vxor.u32 %v1079, 2147483648
      %v1096 = vmul.f32 %v1080, 1.442695
      %v1097 = vpow.pop %v1096
      %v1098 = vmul.f32 %v1081, 1.442695
      %v1099 = vpow.pop %v1098
      %v1100 = vmul.f32 %v1082, 1.442695
      %v1101 = vpow.pop %v1100
      %v1102 = vmul.f32 %v1083, 1.442695
      %v1103 = vpow.pop %v1102
      %v1104 = vmul.f32 %v1084, 1.442695
      %v1105 = vpow.pop %v1104
      %v1106 = vmul.f32 %v1085, 1.442695
      %v1107 = vpow.pop %v1106
      %v1108 = vmul.f32 %v1086, 1.442695
      %v1109 = vpow.pop %v1108
      %v1110 = vmul.f32 %v1087, 1.442695
      %v1111 = vpow.pop %v1110
      %v1112 = vmul.f32 %v1088, 1.442695
      %v1113 = vpow.pop %v1112
      %v1114 = vmul.f32 %v1089, 1.442695
      %v1115 = vpow.pop %v1114
      %v1116 = vmul.f32 %v1090, 1.442695
      %v1117 = vpow.pop %v1116
      %v1118 = vmul.f32 %v1091, 1.442695
      %v1119 = vpow.pop %v1118
      %v1120 = vmul.f32 %v1092, 1.442695
      %v1121 = vpow.pop %v1120
      %v1122 = vmul.f32 %v1093, 1.442695
      %v1123 = vpow.pop %v1122
      %v1124 = vmul.f32 %v1094, 1.442695
      %v1125 = vpow.pop %v1124
      %v1126 = vmul.f32 %v1095, 1.442695
      %v1127 = vpow.pop %v1126
      %v1128 = vadd.f32 %v1097, 1.0
      %v1129 = vadd.f32 %v1099, 1.0
      %v1130 = vadd.f32 %v1101, 1.0
      %v1131 = vadd.f32 %v1103, 1.0
      %v1132 = vadd.f32 %v1105, 1.0
      %v1133 = vadd.f32 %v1107, 1.0
      %v1134 = vadd.f32 %v1109, 1.0
      %v1135 = vadd.f32 %v1111, 1.0
      %v1136 = vadd.f32 %v1113, 1.0
      %v1137 = vadd.f32 %v1115, 1.0
      %v1138 = vadd.f32 %v1117, 1.0
      %v1139 = vadd.f32 %v1119, 1.0
      %v1140 = vadd.f32 %v1121, 1.0
      %v1141 = vadd.f32 %v1123, 1.0
      %v1142 = vadd.f32 %v1125, 1.0
      %v1143 = vadd.f32 %v1127, 1.0
      %v1144 = vrcp.pop %v1128
      %v1145 = vmul.f32 1.0, %v1144
      %v1146 = vrcp.pop %v1129
      %v1147 = vmul.f32 1.0, %v1146
      %v1148 = vrcp.pop %v1130
      %v1149 = vmul.f32 1.0, %v1148
      %v1150 = vrcp.pop %v1131
      %v1151 = vmul.f32 1.0, %v1150
      %v1152 = vrcp.pop %v1132
      %v1153 = vmul.f32 1.0, %v1152
      %v1154 = vrcp.pop %v1133
      %v1155 = vmul.f32 1.0, %v1154
      %v1156 = vrcp.pop %v1134
      %v1157 = vmul.f32 1.0, %v1156
      %v1158 = vrcp.pop %v1135
      %v1159 = vmul.f32 1.0, %v1158
      %v1160 = vrcp.pop %v1136
      %v1161 = vmul.f32 1.0, %v1160
      %v1162 = vrcp.pop %v1137
      %v1163 = vmul.f32 1.0, %v1162
      %v1164 = vrcp.pop %v1138
      %v1165 = vmul.f32 1.0, %v1164
      %v1166 = vrcp.pop %v1139
      %v1167 = vmul.f32 1.0, %v1166
      %v1168 = vrcp.pop %v1140
      %v1169 = vmul.f32 1.0, %v1168
      %v1170 = vrcp.pop %v1141
      %v1171 = vmul.f32 1.0, %v1170
      %v1172 = vrcp.pop %v1142
      %v1173 = vmul.f32 1.0, %v1172
      %v1174 = vrcp.pop %v1143
      %v1175 = vmul.f32 1.0, %v1174
      %vm1176 = vcmask 7168
      %1177 = vst.msk [vmem:[%s312] sm:$0xff] %vm1176, %v1145
      %1178 = vst.msk [vmem:[%s312 + $0x8] sm:$0xff] %vm1176, %v1147
      %1179 = vst.msk [vmem:[%s312 + $0x10] sm:$0xff] %vm1176, %v1149
      %1180 = vst.msk [vmem:[%s312 + $0x18] sm:$0xff] %vm1176, %v1151
      %1181 = vst.msk [vmem:[%s312 + $0x20] sm:$0xff] %vm1176, %v1153
      %1182 = vst.msk [vmem:[%s312 + $0x28] sm:$0xff] %vm1176, %v1155
      %1183 = vst.msk [vmem:[%s312 + $0x30] sm:$0xff] %vm1176, %v1157
      %1184 = vst.msk [vmem:[%s312 + $0x38] sm:$0xff] %vm1176, %v1159
      %1185 = vst.msk [vmem:[%s312 + $0x40] sm:$0xff] %vm1176, %v1161
      %1186 = vst.msk [vmem:[%s312 + $0x48] sm:$0xff] %vm1176, %v1163
      %1187 = vst.msk [vmem:[%s312 + $0x50] sm:$0xff] %vm1176, %v1165
      %1188 = vst.msk [vmem:[%s312 + $0x58] sm:$0xff] %vm1176, %v1167
      %1189 = vst.msk [vmem:[%s312 + $0x60] sm:$0xff] %vm1176, %v1169
      %1190 = vst.msk [vmem:[%s312 + $0x68] sm:$0xff] %vm1176, %v1171
      %1191 = vst.msk [vmem:[%s312 + $0x70] sm:$0xff] %vm1176, %v1173
      %1192 = vst.msk [vmem:[%s312 + $0x78] sm:$0xff] %vm1176, %v1175
      %s1193 = smul.u32 16, %s21
      %p1194 = scmp.lt.s32.totalorder %s1193, 47
      %s1195 = scalar_select %p1194, %s1193, 47
      %s1196 = smul.addr %s1195, 8
      %s1197 = scalar_lea.vmem %s8, %s1196
      // Predicated region
      $region53: #{tpu_custom_call.1} parent=51 // pred_check
        %p1198 = pneg %p212
      $region54: #{tpu_custom_call.1} parent=51 // pred_check_branch
        %1200 = sbr.rel (%p1198) target = $region56
      $region55: #{tpu_custom_call.1} parent=51 // pred_region
        %s1201 = smul.u32 16, %s21
      $region56: #{tpu_custom_call.1} parent=51 // pred_fallthru
        _
    $region52: #{tpu_custom_call.1} parent=5 // pred_fallthru
      _
    %p1202 = scmp.le.s32.totalorder 2, %s16
    // Predicated region
    $region57: #{tpu_custom_call.1} parent=5 // pred_check
      %p1203 = pneg %p1202
    $region58: #{tpu_custom_call.1} parent=5 // pred_check_branch
      %1205 = sbr.rel (%p1203) target = $region60
    $region59: #{tpu_custom_call.1} parent=5 // pred_region
      %s1206 = ssub.s32 %s16, 2
      // Predicated region
      $region61: #{tpu_custom_call.1} parent=59 // pred_check
        %p1207 = pneg %p218
      $region62: #{tpu_custom_call.1} parent=59 // pred_check_branch
        %1209 = sbr.rel (%p1207) target = $region64
      $region63: #{tpu_custom_call.1} parent=59 // pred_region
        %s1210 = smul.u32 16, %s22
        %p1211 = scmp.lt.s32.totalorder %s1210, 47
        %s1212 = scalar_select %p1211, %s1210, 47
        %s1213 = smul.addr %s1212, 8
        %s1214 = scalar_lea.vmem %s8, %s1213
      $region64: #{tpu_custom_call.1} parent=59 // pred_fallthru
        _
    $region60: #{tpu_custom_call.1} parent=5 // pred_fallthru
      _
  $region6: #{tpu_custom_call.1} parent=0 // loop_footer
    %s20 = sadd.s32 1, %s16
  $region7: #{tpu_custom_call.1} parent=0 // loop_footer_branch
    %15 = sbr.rel target = $region3
  $region8: #{tpu_custom_call.1} parent=0 // loop_exit
    _

</llo_original>
